<compile_context>
chip_gen: v6e
topology: v6e:2x2x1
jax: 0.10.0
libtpu: 0.0.40
codegen_flags: <defaults>
</compile_context>

<pallas_src>
import functools

import jax
import jax.numpy as jnp
from jax.experimental import pallas as pl
from jax.experimental.pallas import tpu as pltpu  # noqa: F401  (not needed at this size)


# ---------------------------------------------------------------------------
# Fused kernel: both LSTM layers (wavefront-interleaved) + FC + sigmoid.
# ---------------------------------------------------------------------------
def _fused_fatigue_kernel(T, B, H,
                          x_ref, wih0_ref, whh0_ref, b0_ref,
                          w1_ref, b1_ref, wfc_ref, bfc_ref, out_ref):
    G = 4 * H
    f32 = jnp.float32

    # Per-column scale/offset applied after the single fused tanh:
    #   i/f/o columns (weights pre-scaled by 0.5): 0.5*tanh(.) + 0.5 == sigmoid
    #   g columns:                                 1.0*tanh(.) + 0.0 == tanh
    col = jax.lax.broadcasted_iota(jnp.int32, (1, G), 1)
    is_g = jnp.logical_and(col >= 2 * H, col < 3 * H)
    post_scale = jnp.where(is_g, f32(1.0), f32(0.5))
    post_off = f32(1.0) - post_scale

    def activate(pre):                                  # pre: (B, 4H) f32
        act = jnp.tanh(pre) * post_scale + post_off     # ONE EUP push + one FMA
        i = act[:, 0 * H:1 * H]
        f = act[:, 1 * H:2 * H]
        g = act[:, 2 * H:3 * H]
        o = act[:, 3 * H:4 * H]
        return i, f, g, o

    # Layer-0 input projection for ALL timesteps: one batched MXU matmul.
    xproj0 = jnp.dot(x_ref[...], wih0_ref[...],
                     preferred_element_type=f32) + b0_ref[...]   # (T*B, 4H) f32

    # Loop-invariant recurrent weights: read once, kept resident across steps.
    whh0 = whh0_ref[...]        # (H, 4H)  bf16
    w1 = w1_ref[...]            # (2H, 4H) bf16  == [W_hh1^T ; W_ih1^T]
    b1 = b1_ref[...]            # (1, 4H)  f32

    def step0(t, h0, c0):
        pre = xproj0[t * B:(t + 1) * B, :] + jnp.dot(
            h0.astype(jnp.bfloat16), whh0, preferred_element_type=f32)
        i, f, g, o = activate(pre)
        c0 = f * c0 + i * g
        h0 = o * jnp.tanh(c0)
        return h0, c0

    def step1(h0_t, h1, c1):
        # Fold layer-1's input projection into its recurrent matmul.
        lhs = jnp.concatenate([h1, h0_t], axis=1).astype(jnp.bfloat16)   # (B, 2H)
        pre = jnp.dot(lhs, w1, preferred_element_type=f32) + b1
        i, f, g, o = activate(pre)
        c1 = f * c1 + i * g
        h1 = o * jnp.tanh(c1)
        return h1, c1

    zeros = jnp.zeros((B, H), f32)
    h0, c0 = zeros, zeros
    h1, c1 = zeros, zeros

    # Wavefront schedule: layer-0 step t and layer-1 step t-1 are data
    # independent, so their serial MXU->EUP chains overlap (depth ~T+1, not 2T).
    # TODO(synk): for long sequences switch to lax.fori_loop with h/c in VMEM
    # scratch to keep trace/compile time bounded.
    h0, c0 = step0(0, h0, c0)
    for t in range(1, T):
        nh0, nc0 = step0(t, h0, c0)          # layer 0, time t
        h1, c1 = step1(h0, h1, c1)           # layer 1, time t-1 (old h0)
        h0, c0 = nh0, nc0
    h1, c1 = step1(h0, h1, c1)               # layer 1, time T-1

    # FC head + sigmoid, kept in f32 (single tiny matmul off the serial path).
    logits = jnp.dot(h1, wfc_ref[...], preferred_element_type=f32) + bfc_ref[...]
    out_ref[...] = f32(0.5) * jnp.tanh(f32(0.5) * logits) + f32(0.5)


@jax.jit
def fatigue_lstm_forward(kparams, x):
    """x: (B, T, input_size) -> (B, output_size).  Matches the PyTorch module
    with h0 = c0 = 0 in eval mode."""
    # TODO(synk): nn.LSTM inter-layer dropout (p=0.3) is a training-time op;
    # eval/inference semantics (no dropout) are implemented here.
    B, T, D = x.shape
    H = kparams["w_hh0_t"].shape[0]
    O = kparams["w_fc_t"].shape[1]

    # time-major, flattened to (T*B, D): row t*B + b == x[b, t, :]
    x_tm = jnp.transpose(x, (1, 0, 2)).reshape(T * B, D).astype(jnp.bfloat16)

    inputs = [x_tm,
              kparams["w_ih0_t"], kparams["w_hh0_t"], kparams["b0"],
              kparams["w1_comb"], kparams["b1"],
              kparams["w_fc_t"], kparams["b_fc"]]
    in_specs = [pl.BlockSpec(a.shape, lambda: (0, 0)) for a in inputs]

    kernel = functools.partial(_fused_fatigue_kernel, T, B, H)

    # grid=(): both layers, FC head and sigmoid run in one kernel invocation;
    # all weights + activations live in VMEM.
    # TODO(synk): for large batches add a leading "parallel" batch grid axis
    # to use the second TensorCore on v7x.
    return pl.pallas_call(
        kernel,
        out_shape=jax.ShapeDtypeStruct((B, O), jnp.float32),
        in_specs=in_specs,
        out_specs=pl.BlockSpec((B, O), lambda: (0, 0)),
    )(*inputs)


# ---------------------------------------------------------------------------
# Parameter creation (raw PyTorch layout) and kernel-layout preparation.
# ---------------------------------------------------------------------------
def init_params_raw(key, input_size, hidden_size, num_layers, output_size):
    params = {"layers": []}
    bound = 1.0 / (hidden_size ** 0.5)
    for layer in range(num_layers):
        d_in = input_size if layer == 0 else hidden_size
        key, k1, k2, k3, k4 = jax.random.split(key, 5)
        params["layers"].append({
            "w_ih": jax.random.uniform(k1, (4 * hidden_size, d_in), jnp.float32, -bound, bound),
            "w_hh": jax.random.uniform(k2, (4 * hidden_size, hidden_size), jnp.float32, -bound, bound),
            "b_ih": jax.random.uniform(k3, (4 * hidden_size,), jnp.float32, -bound, bound),
            "b_hh": jax.random.uniform(k4, (4 * hidden_size,), jnp.float32, -bound, bound),
        })
    key, k5, k6 = jax.random.split(key, 3)
    params["w_fc"] = jax.random.uniform(k5, (output_size, hidden_size), jnp.float32, -bound, bound)
    params["b_fc"] = jax.random.uniform(k6, (output_size,), jnp.float32, -bound, bound)
    return params


def prepare_kernel_params(raw):
    """Transpose, fuse b_ih+b_hh, fold the 0.5 sigmoid pre-scale into the
    i/f/o gate columns, pack layer-1's [W_hh; W_ih] into one RHS, and store
    matmul weights in bfloat16 (biases / FC head stay f32).  No gate padding:
    the packed 4H gate block is the lane-aligned unit."""
    assert len(raw["layers"]) == 2, "kernel implements the 2-layer configuration"
    H = raw["layers"][0]["w_hh"].shape[1]
    col_scale = jnp.concatenate([jnp.full((H,), 0.5, jnp.float32),   # i
                                 jnp.full((H,), 0.5, jnp.float32),   # f
                                 jnp.ones((H,), jnp.float32),        # g
                                 jnp.full((H,), 0.5, jnp.float32)])  # o

    def prep_w(w):   # PyTorch (4H, d) -> (d, 4H); i/f/o columns pre-scaled by 0.5
        return (w * col_scale[:, None]).T.astype(jnp.bfloat16)

    def prep_b(lp):
        return ((lp["b_ih"] + lp["b_hh"]) * col_scale)[None, :].astype(jnp.float32)

    l0, l1 = raw["layers"]
    return {
        "w_ih0_t": prep_w(l0["w_ih"]),                                 # (D,  4H) bf16
        "w_hh0_t": prep_w(l0["w_hh"]),                                 # (H,  4H) bf16
        "b0": prep_b(l0),                                              # (1,  4H) f32
        # gates1 = [h1_{t-1}, h0_t] @ [W_hh1^T ; W_ih1^T] + b1
        "w1_comb": jnp.concatenate([prep_w(l1["w_hh"]),
                                    prep_w(l1["w_ih"])], axis=0),      # (2H, 4H) bf16
        "b1": prep_b(l1),                                              # (1,  4H) f32
        "w_fc_t": raw["w_fc"].T.astype(jnp.float32),                   # (H,  O)  f32
        "b_fc": raw["b_fc"][None, :].astype(jnp.float32),              # (1,  O)  f32
    }


# ---------------------------------------------------------------------------
# Pure-JAX reference (standard LSTM math on the raw/unpadded parameters).
# `cast_in` is applied to matmul operands: identity -> exact f32 reference;
# bf16 round-trip -> mirrors the kernel's MXU operand precision.
# ---------------------------------------------------------------------------
def reference_forward(raw, x, cast_in=lambda a: a):
    x_seq = jnp.transpose(x, (1, 0, 2)).astype(jnp.float32)  # (T, B, D)
    h_seq = x_seq
    H = raw["layers"][0]["w_hh"].shape[1]
    B = x.shape[0]
    for lp in raw["layers"]:
        w_ih_t = lp["w_ih"].T
        w_hh_t = lp["w_hh"].T
        bias = (lp["b_ih"] + lp["b_hh"])[None, :]

        def step(carry, x_t, w_ih_t=w_ih_t, w_hh_t=w_hh_t, bias=bias):
            h, c = carry
            gates = (cast_in(x_t) @ cast_in(w_ih_t)
                     + cast_in(h) @ cast_in(w_hh_t) + bias)
            i = jax.nn.sigmoid(gates[:, 0 * H:1 * H])
            f = jax.nn.sigmoid(gates[:, 1 * H:2 * H])
            g = jnp.tanh(gates[:, 2 * H:3 * H])
            o = jax.nn.sigmoid(gates[:, 3 * H:4 * H])
            c = f * c + i * g
            h = o * jnp.tanh(c)
            return (h, c), h

        init = (jnp.zeros((B, H), jnp.float32), jnp.zeros((B, H), jnp.float32))
        _, h_seq = jax.lax.scan(step, init, h_seq)
    out = h_seq[-1] @ raw["w_fc"].T + raw["b_fc"][None, :]   # FC head stays f32
    return jax.nn.sigmoid(out)


if __name__ == "__main__":
    # Small shapes consistent with the module: joint-angle features over a window.
    batch, seq_len = 2, 8
    input_size, hidden_size, num_layers, output_size = 12, 32, 2, 1

    key = jax.random.PRNGKey(0)
    key, pkey, xkey = jax.random.split(key, 3)
    raw_params = init_params_raw(pkey, input_size, hidden_size, num_layers, output_size)
    kparams = prepare_kernel_params(raw_params)
    x = jax.random.normal(xkey, (batch, seq_len, input_size), jnp.float32)

    out = fatigue_lstm_forward(kparams, x)
    out = jax.block_until_ready(out)
    assert out.shape == (batch, output_size)

    # Tight check vs. a reference that rounds matmul operands to bf16 exactly
    # like the kernel (isolates wiring/semantics from precision).
    bf16_rt = lambda a: a.astype(jnp.bfloat16).astype(jnp.float32)
    ref_mixed = reference_forward(raw_params, x, cast_in=bf16_rt)
    assert jnp.allclose(out, ref_mixed, atol=2e-3, rtol=2e-3), (out, ref_mixed)

    # Loose check vs. the exact f32 reference (tolerance accounts for bf16
    # MXU operands with f32 accumulation).
    ref_f32 = reference_forward(raw_params, x)
    assert jnp.allclose(out, ref_f32, atol=2e-2, rtol=2e-2), (out, ref_f32)

    print("KERNEL_OK")
</pallas_src>

<mosaic_0001>
module attributes {stable_mosaic.version = 11 : i64} {
  func.func @_fused_fatigue_kernel(%arg0: memref<16x12xbf16, #tpu.memory_space<vmem>>, %arg1: memref<12x128xbf16, #tpu.memory_space<vmem>>, %arg2: memref<32x128xbf16, #tpu.memory_space<vmem>>, %arg3: memref<1x128xf32, #tpu.memory_space<vmem>>, %arg4: memref<64x128xbf16, #tpu.memory_space<vmem>>, %arg5: memref<1x128xf32, #tpu.memory_space<vmem>>, %arg6: memref<32x1xf32, #tpu.memory_space<vmem>>, %arg7: memref<1x1xf32, #tpu.memory_space<vmem>>, %arg8: memref<2x1xf32, #tpu.memory_space<vmem>>) attributes {dimension_semantics = [], scalar_prefetch = 0 : i64, scratch_operands = 0 : i64, tpu.core_type = #tpu.core_type<tc>} {
    %0 = tpu.iota {dimensions = array<i32: 1>} : vector<1x128xi32>
    %c64_i32 = arith.constant 64 : i32
    %1 = vector.broadcast %c64_i32 : i32 to vector<1x128xi32>
    %2 = arith.cmpi sge, %0, %1 : vector<1x128xi32>
    %c96_i32 = arith.constant 96 : i32
    %3 = vector.broadcast %c96_i32 : i32 to vector<1x128xi32>
    %4 = arith.cmpi slt, %0, %3 : vector<1x128xi32>
    %5 = arith.andi %2, %4 : vector<1x128xi1>
    %cst = arith.constant 1.000000e+00 : f32
    %cst_0 = arith.constant 5.000000e-01 : f32
    %6 = vector.broadcast %cst : f32 to vector<1x128xf32>
    %7 = vector.broadcast %cst_0 : f32 to vector<1x128xf32>
    %8 = arith.select %5, %6, %7 : vector<1x128xi1>, vector<1x128xf32>
    %cst_1 = arith.constant 1.000000e+00 : f32
    %9 = vector.broadcast %cst_1 : f32 to vector<1x128xf32>
    %10 = arith.subf %9, %8 : vector<1x128xf32>
    %c0 = arith.constant 0 : index
    %c0_2 = arith.constant 0 : index
    %11 = vector.load %arg0[%c0, %c0_2] : memref<16x12xbf16, #tpu.memory_space<vmem>>, vector<16x12xbf16>
    %c0_3 = arith.constant 0 : index
    %c0_4 = arith.constant 0 : index
    %12 = vector.load %arg1[%c0_3, %c0_4] : memref<12x128xbf16, #tpu.memory_space<vmem>>, vector<12x128xbf16>
    %cst_5 = arith.constant dense<0.000000e+00> : vector<16x128xf32>
    %13 = tpu.matmul %11, %12, %cst_5 {dimension_numbers = #tpu.dot_dimension_numbers<[1], [0], [0], [1], [0, 0, 1, 1], [], []>} : vector<16x12xbf16>, vector<12x128xbf16>, vector<16x128xf32> -> vector<16x128xf32>
    %c0_6 = arith.constant 0 : index
    %c0_7 = arith.constant 0 : index
    %14 = vector.load %arg3[%c0_6, %c0_7] : memref<1x128xf32, #tpu.memory_space<vmem>>, vector<1x128xf32>
    %15 = vector.broadcast %14 : vector<1x128xf32> to vector<16x128xf32>
    %16 = arith.addf %13, %15 : vector<16x128xf32>
    %c0_8 = arith.constant 0 : index
    %c0_9 = arith.constant 0 : index
    %17 = vector.load %arg2[%c0_8, %c0_9] : memref<32x128xbf16, #tpu.memory_space<vmem>>, vector<32x128xbf16>
    %c0_10 = arith.constant 0 : index
    %c0_11 = arith.constant 0 : index
    %18 = vector.load %arg4[%c0_10, %c0_11] : memref<64x128xbf16, #tpu.memory_space<vmem>>, vector<64x128xbf16>
    %c0_12 = arith.constant 0 : index
    %c0_13 = arith.constant 0 : index
    %19 = vector.load %arg5[%c0_12, %c0_13] : memref<1x128xf32, #tpu.memory_space<vmem>>, vector<1x128xf32>
    %cst_14 = arith.constant 0.000000e+00 : f32
    %20 = vector.broadcast %cst_14 : f32 to vector<2x32xf32>
    %21 = vector.extract_strided_slice %16 {offsets = [0, 0], sizes = [2, 128], strides = [1, 1]} : vector<16x128xf32> to vector<2x128xf32>
    %22 = arith.truncf %20 : vector<2x32xf32> to vector<2x32xbf16>
    %cst_15 = arith.constant dense<0.000000e+00> : vector<2x128xf32>
    %23 = tpu.matmul %22, %17, %cst_15 {dimension_numbers = #tpu.dot_dimension_numbers<[1], [0], [0], [1], [0, 0, 1, 1], [], []>} : vector<2x32xbf16>, vector<32x128xbf16>, vector<2x128xf32> -> vector<2x128xf32>
    %24 = arith.addf %21, %23 : vector<2x128xf32>
    %25 = math.tanh %24 : vector<2x128xf32>
    %26 = vector.broadcast %8 : vector<1x128xf32> to vector<2x128xf32>
    %27 = arith.mulf %25, %26 : vector<2x128xf32>
    %28 = vector.broadcast %10 : vector<1x128xf32> to vector<2x128xf32>
    %29 = arith.addf %27, %28 : vector<2x128xf32>
    %30 = vector.extract_strided_slice %29 {offsets = [0, 0], sizes = [2, 32], strides = [1, 1]} : vector<2x128xf32> to vector<2x32xf32>
    %31 = vector.extract_strided_slice %29 {offsets = [0, 32], sizes = [2, 32], strides = [1, 1]} : vector<2x128xf32> to vector<2x32xf32>
    %32 = vector.extract_strided_slice %29 {offsets = [0, 64], sizes = [2, 32], strides = [1, 1]} : vector<2x128xf32> to vector<2x32xf32>
    %33 = vector.extract_strided_slice %29 {offsets = [0, 96], sizes = [2, 32], strides = [1, 1]} : vector<2x128xf32> to vector<2x32xf32>
    %34 = arith.mulf %31, %20 : vector<2x32xf32>
    %35 = arith.mulf %30, %32 : vector<2x32xf32>
    %36 = arith.addf %34, %35 : vector<2x32xf32>
    %37 = math.tanh %36 : vector<2x32xf32>
    %38 = arith.mulf %33, %37 : vector<2x32xf32>
    %39 = vector.extract_strided_slice %16 {offsets = [2, 0], sizes = [2, 128], strides = [1, 1]} : vector<16x128xf32> to vector<2x128xf32>
    %40 = arith.truncf %38 : vector<2x32xf32> to vector<2x32xbf16>
    %cst_16 = arith.constant dense<0.000000e+00> : vector<2x128xf32>
    %41 = tpu.matmul %40, %17, %cst_16 {dimension_numbers = #tpu.dot_dimension_numbers<[1], [0], [0], [1], [0, 0, 1, 1], [], []>} : vector<2x32xbf16>, vector<32x128xbf16>, vector<2x128xf32> -> vector<2x128xf32>
    %42 = arith.addf %39, %41 : vector<2x128xf32>
    %43 = math.tanh %42 : vector<2x128xf32>
    %44 = vector.broadcast %8 : vector<1x128xf32> to vector<2x128xf32>
    %45 = arith.mulf %43, %44 : vector<2x128xf32>
    %46 = vector.broadcast %10 : vector<1x128xf32> to vector<2x128xf32>
    %47 = arith.addf %45, %46 : vector<2x128xf32>
    %48 = vector.extract_strided_slice %47 {offsets = [0, 0], sizes = [2, 32], strides = [1, 1]} : vector<2x128xf32> to vector<2x32xf32>
    %49 = vector.extract_strided_slice %47 {offsets = [0, 32], sizes = [2, 32], strides = [1, 1]} : vector<2x128xf32> to vector<2x32xf32>
    %50 = vector.extract_strided_slice %47 {offsets = [0, 64], sizes = [2, 32], strides = [1, 1]} : vector<2x128xf32> to vector<2x32xf32>
    %51 = vector.extract_strided_slice %47 {offsets = [0, 96], sizes = [2, 32], strides = [1, 1]} : vector<2x128xf32> to vector<2x32xf32>
    %52 = arith.mulf %49, %36 : vector<2x32xf32>
    %53 = arith.mulf %48, %50 : vector<2x32xf32>
    %54 = arith.addf %52, %53 : vector<2x32xf32>
    %55 = math.tanh %54 : vector<2x32xf32>
    %56 = arith.mulf %51, %55 : vector<2x32xf32>
    %57 = tpu.concatenate %20, %38 in 1 : vector<2x32xf32>, vector<2x32xf32> -> vector<2x64xf32>
    %58 = arith.truncf %57 : vector<2x64xf32> to vector<2x64xbf16>
    %cst_17 = arith.constant dense<0.000000e+00> : vector<2x128xf32>
    %59 = tpu.matmul %58, %18, %cst_17 {dimension_numbers = #tpu.dot_dimension_numbers<[1], [0], [0], [1], [0, 0, 1, 1], [], []>} : vector<2x64xbf16>, vector<64x128xbf16>, vector<2x128xf32> -> vector<2x128xf32>
    %60 = vector.broadcast %19 : vector<1x128xf32> to vector<2x128xf32>
    %61 = arith.addf %59, %60 : vector<2x128xf32>
    %62 = math.tanh %61 : vector<2x128xf32>
    %63 = vector.broadcast %8 : vector<1x128xf32> to vector<2x128xf32>
    %64 = arith.mulf %62, %63 : vector<2x128xf32>
    %65 = vector.broadcast %10 : vector<1x128xf32> to vector<2x128xf32>
    %66 = arith.addf %64, %65 : vector<2x128xf32>
    %67 = vector.extract_strided_slice %66 {offsets = [0, 0], sizes = [2, 32], strides = [1, 1]} : vector<2x128xf32> to vector<2x32xf32>
    %68 = vector.extract_strided_slice %66 {offsets = [0, 32], sizes = [2, 32], strides = [1, 1]} : vector<2x128xf32> to vector<2x32xf32>
    %69 = vector.extract_strided_slice %66 {offsets = [0, 64], sizes = [2, 32], strides = [1, 1]} : vector<2x128xf32> to vector<2x32xf32>
    %70 = vector.extract_strided_slice %66 {offsets = [0, 96], sizes = [2, 32], strides = [1, 1]} : vector<2x128xf32> to vector<2x32xf32>
    %71 = arith.mulf %68, %20 : vector<2x32xf32>
    %72 = arith.mulf %67, %69 : vector<2x32xf32>
    %73 = arith.addf %71, %72 : vector<2x32xf32>
    %74 = math.tanh %73 : vector<2x32xf32>
    %75 = arith.mulf %70, %74 : vector<2x32xf32>
    %76 = vector.extract_strided_slice %16 {offsets = [4, 0], sizes = [2, 128], strides = [1, 1]} : vector<16x128xf32> to vector<2x128xf32>
    %77 = arith.truncf %56 : vector<2x32xf32> to vector<2x32xbf16>
    %cst_18 = arith.constant dense<0.000000e+00> : vector<2x128xf32>
    %78 = tpu.matmul %77, %17, %cst_18 {dimension_numbers = #tpu.dot_dimension_numbers<[1], [0], [0], [1], [0, 0, 1, 1], [], []>} : vector<2x32xbf16>, vector<32x128xbf16>, vector<2x128xf32> -> vector<2x128xf32>
    %79 = arith.addf %76, %78 : vector<2x128xf32>
    %80 = math.tanh %79 : vector<2x128xf32>
    %81 = vector.broadcast %8 : vector<1x128xf32> to vector<2x128xf32>
    %82 = arith.mulf %80, %81 : vector<2x128xf32>
    %83 = vector.broadcast %10 : vector<1x128xf32> to vector<2x128xf32>
    %84 = arith.addf %82, %83 : vector<2x128xf32>
    %85 = vector.extract_strided_slice %84 {offsets = [0, 0], sizes = [2, 32], strides = [1, 1]} : vector<2x128xf32> to vector<2x32xf32>
    %86 = vector.extract_strided_slice %84 {offsets = [0, 32], sizes = [2, 32], strides = [1, 1]} : vector<2x128xf32> to vector<2x32xf32>
    %87 = vector.extract_strided_slice %84 {offsets = [0, 64], sizes = [2, 32], strides = [1, 1]} : vector<2x128xf32> to vector<2x32xf32>
    %88 = vector.extract_strided_slice %84 {offsets = [0, 96], sizes = [2, 32], strides = [1, 1]} : vector<2x128xf32> to vector<2x32xf32>
    %89 = arith.mulf %86, %54 : vector<2x32xf32>
    %90 = arith.mulf %85, %87 : vector<2x32xf32>
    %91 = arith.addf %89, %90 : vector<2x32xf32>
    %92 = math.tanh %91 : vector<2x32xf32>
    %93 = arith.mulf %88, %92 : vector<2x32xf32>
    %94 = tpu.concatenate %75, %56 in 1 : vector<2x32xf32>, vector<2x32xf32> -> vector<2x64xf32>
    %95 = arith.truncf %94 : vector<2x64xf32> to vector<2x64xbf16>
    %cst_19 = arith.constant dense<0.000000e+00> : vector<2x128xf32>
    %96 = tpu.matmul %95, %18, %cst_19 {dimension_numbers = #tpu.dot_dimension_numbers<[1], [0], [0], [1], [0, 0, 1, 1], [], []>} : vector<2x64xbf16>, vector<64x128xbf16>, vector<2x128xf32> -> vector<2x128xf32>
    %97 = vector.broadcast %19 : vector<1x128xf32> to vector<2x128xf32>
    %98 = arith.addf %96, %97 : vector<2x128xf32>
    %99 = math.tanh %98 : vector<2x128xf32>
    %100 = vector.broadcast %8 : vector<1x128xf32> to vector<2x128xf32>
    %101 = arith.mulf %99, %100 : vector<2x128xf32>
    %102 = vector.broadcast %10 : vector<1x128xf32> to vector<2x128xf32>
    %103 = arith.addf %101, %102 : vector<2x128xf32>
    %104 = vector.extract_strided_slice %103 {offsets = [0, 0], sizes = [2, 32], strides = [1, 1]} : vector<2x128xf32> to vector<2x32xf32>
    %105 = vector.extract_strided_slice %103 {offsets = [0, 32], sizes = [2, 32], strides = [1, 1]} : vector<2x128xf32> to vector<2x32xf32>
    %106 = vector.extract_strided_slice %103 {offsets = [0, 64], sizes = [2, 32], strides = [1, 1]} : vector<2x128xf32> to vector<2x32xf32>
    %107 = vector.extract_strided_slice %103 {offsets = [0, 96], sizes = [2, 32], strides = [1, 1]} : vector<2x128xf32> to vector<2x32xf32>
    %108 = arith.mulf %105, %73 : vector<2x32xf32>
    %109 = arith.mulf %104, %106 : vector<2x32xf32>
    %110 = arith.addf %108, %109 : vector<2x32xf32>
    %111 = math.tanh %110 : vector<2x32xf32>
    %112 = arith.mulf %107, %111 : vector<2x32xf32>
    %113 = vector.extract_strided_slice %16 {offsets = [6, 0], sizes = [2, 128], strides = [1, 1]} : vector<16x128xf32> to vector<2x128xf32>
    %114 = arith.truncf %93 : vector<2x32xf32> to vector<2x32xbf16>
    %cst_20 = arith.constant dense<0.000000e+00> : vector<2x128xf32>
    %115 = tpu.matmul %114, %17, %cst_20 {dimension_numbers = #tpu.dot_dimension_numbers<[1], [0], [0], [1], [0, 0, 1, 1], [], []>} : vector<2x32xbf16>, vector<32x128xbf16>, vector<2x128xf32> -> vector<2x128xf32>
    %116 = arith.addf %113, %115 : vector<2x128xf32>
    %117 = math.tanh %116 : vector<2x128xf32>
    %118 = vector.broadcast %8 : vector<1x128xf32> to vector<2x128xf32>
    %119 = arith.mulf %117, %118 : vector<2x128xf32>
    %120 = vector.broadcast %10 : vector<1x128xf32> to vector<2x128xf32>
    %121 = arith.addf %119, %120 : vector<2x128xf32>
    %122 = vector.extract_strided_slice %121 {offsets = [0, 0], sizes = [2, 32], strides = [1, 1]} : vector<2x128xf32> to vector<2x32xf32>
    %123 = vector.extract_strided_slice %121 {offsets = [0, 32], sizes = [2, 32], strides = [1, 1]} : vector<2x128xf32> to vector<2x32xf32>
    %124 = vector.extract_strided_slice %121 {offsets = [0, 64], sizes = [2, 32], strides = [1, 1]} : vector<2x128xf32> to vector<2x32xf32>
    %125 = vector.extract_strided_slice %121 {offsets = [0, 96], sizes = [2, 32], strides = [1, 1]} : vector<2x128xf32> to vector<2x32xf32>
    %126 = arith.mulf %123, %91 : vector<2x32xf32>
    %127 = arith.mulf %122, %124 : vector<2x32xf32>
    %128 = arith.addf %126, %127 : vector<2x32xf32>
    %129 = math.tanh %128 : vector<2x32xf32>
    %130 = arith.mulf %125, %129 : vector<2x32xf32>
    %131 = tpu.concatenate %112, %93 in 1 : vector<2x32xf32>, vector<2x32xf32> -> vector<2x64xf32>
    %132 = arith.truncf %131 : vector<2x64xf32> to vector<2x64xbf16>
    %cst_21 = arith.constant dense<0.000000e+00> : vector<2x128xf32>
    %133 = tpu.matmul %132, %18, %cst_21 {dimension_numbers = #tpu.dot_dimension_numbers<[1], [0], [0], [1], [0, 0, 1, 1], [], []>} : vector<2x64xbf16>, vector<64x128xbf16>, vector<2x128xf32> -> vector<2x128xf32>
    %134 = vector.broadcast %19 : vector<1x128xf32> to vector<2x128xf32>
    %135 = arith.addf %133, %134 : vector<2x128xf32>
    %136 = math.tanh %135 : vector<2x128xf32>
    %137 = vector.broadcast %8 : vector<1x128xf32> to vector<2x128xf32>
    %138 = arith.mulf %136, %137 : vector<2x128xf32>
    %139 = vector.broadcast %10 : vector<1x128xf32> to vector<2x128xf32>
    %140 = arith.addf %138, %139 : vector<2x128xf32>
    %141 = vector.extract_strided_slice %140 {offsets = [0, 0], sizes = [2, 32], strides = [1, 1]} : vector<2x128xf32> to vector<2x32xf32>
    %142 = vector.extract_strided_slice %140 {offsets = [0, 32], sizes = [2, 32], strides = [1, 1]} : vector<2x128xf32> to vector<2x32xf32>
    %143 = vector.extract_strided_slice %140 {offsets = [0, 64], sizes = [2, 32], strides = [1, 1]} : vector<2x128xf32> to vector<2x32xf32>
    %144 = vector.extract_strided_slice %140 {offsets = [0, 96], sizes = [2, 32], strides = [1, 1]} : vector<2x128xf32> to vector<2x32xf32>
    %145 = arith.mulf %142, %110 : vector<2x32xf32>
    %146 = arith.mulf %141, %143 : vector<2x32xf32>
    %147 = arith.addf %145, %146 : vector<2x32xf32>
    %148 = math.tanh %147 : vector<2x32xf32>
    %149 = arith.mulf %144, %148 : vector<2x32xf32>
    %150 = vector.extract_strided_slice %16 {offsets = [8, 0], sizes = [2, 128], strides = [1, 1]} : vector<16x128xf32> to vector<2x128xf32>
    %151 = arith.truncf %130 : vector<2x32xf32> to vector<2x32xbf16>
    %cst_22 = arith.constant dense<0.000000e+00> : vector<2x128xf32>
    %152 = tpu.matmul %151, %17, %cst_22 {dimension_numbers = #tpu.dot_dimension_numbers<[1], [0], [0], [1], [0, 0, 1, 1], [], []>} : vector<2x32xbf16>, vector<32x128xbf16>, vector<2x128xf32> -> vector<2x128xf32>
    %153 = arith.addf %150, %152 : vector<2x128xf32>
    %154 = math.tanh %153 : vector<2x128xf32>
    %155 = vector.broadcast %8 : vector<1x128xf32> to vector<2x128xf32>
    %156 = arith.mulf %154, %155 : vector<2x128xf32>
    %157 = vector.broadcast %10 : vector<1x128xf32> to vector<2x128xf32>
    %158 = arith.addf %156, %157 : vector<2x128xf32>
    %159 = vector.extract_strided_slice %158 {offsets = [0, 0], sizes = [2, 32], strides = [1, 1]} : vector<2x128xf32> to vector<2x32xf32>
    %160 = vector.extract_strided_slice %158 {offsets = [0, 32], sizes = [2, 32], strides = [1, 1]} : vector<2x128xf32> to vector<2x32xf32>
    %161 = vector.extract_strided_slice %158 {offsets = [0, 64], sizes = [2, 32], strides = [1, 1]} : vector<2x128xf32> to vector<2x32xf32>
    %162 = vector.extract_strided_slice %158 {offsets = [0, 96], sizes = [2, 32], strides = [1, 1]} : vector<2x128xf32> to vector<2x32xf32>
    %163 = arith.mulf %160, %128 : vector<2x32xf32>
    %164 = arith.mulf %159, %161 : vector<2x32xf32>
    %165 = arith.addf %163, %164 : vector<2x32xf32>
    %166 = math.tanh %165 : vector<2x32xf32>
    %167 = arith.mulf %162, %166 : vector<2x32xf32>
    %168 = tpu.concatenate %149, %130 in 1 : vector<2x32xf32>, vector<2x32xf32> -> vector<2x64xf32>
    %169 = arith.truncf %168 : vector<2x64xf32> to vector<2x64xbf16>
    %cst_23 = arith.constant dense<0.000000e+00> : vector<2x128xf32>
    %170 = tpu.matmul %169, %18, %cst_23 {dimension_numbers = #tpu.dot_dimension_numbers<[1], [0], [0], [1], [0, 0, 1, 1], [], []>} : vector<2x64xbf16>, vector<64x128xbf16>, vector<2x128xf32> -> vector<2x128xf32>
    %171 = vector.broadcast %19 : vector<1x128xf32> to vector<2x128xf32>
    %172 = arith.addf %170, %171 : vector<2x128xf32>
    %173 = math.tanh %172 : vector<2x128xf32>
    %174 = vector.broadcast %8 : vector<1x128xf32> to vector<2x128xf32>
    %175 = arith.mulf %173, %174 : vector<2x128xf32>
    %176 = vector.broadcast %10 : vector<1x128xf32> to vector<2x128xf32>
    %177 = arith.addf %175, %176 : vector<2x128xf32>
    %178 = vector.extract_strided_slice %177 {offsets = [0, 0], sizes = [2, 32], strides = [1, 1]} : vector<2x128xf32> to vector<2x32xf32>
    %179 = vector.extract_strided_slice %177 {offsets = [0, 32], sizes = [2, 32], strides = [1, 1]} : vector<2x128xf32> to vector<2x32xf32>
    %180 = vector.extract_strided_slice %177 {offsets = [0, 64], sizes = [2, 32], strides = [1, 1]} : vector<2x128xf32> to vector<2x32xf32>
    %181 = vector.extract_strided_slice %177 {offsets = [0, 96], sizes = [2, 32], strides = [1, 1]} : vector<2x128xf32> to vector<2x32xf32>
    %182 = arith.mulf %179, %147 : vector<2x32xf32>
    %183 = arith.mulf %178, %180 : vector<2x32xf32>
    %184 = arith.addf %182, %183 : vector<2x32xf32>
    %185 = math.tanh %184 : vector<2x32xf32>
    %186 = arith.mulf %181, %185 : vector<2x32xf32>
    %187 = vector.extract_strided_slice %16 {offsets = [10, 0], sizes = [2, 128], strides = [1, 1]} : vector<16x128xf32> to vector<2x128xf32>
    %188 = arith.truncf %167 : vector<2x32xf32> to vector<2x32xbf16>
    %cst_24 = arith.constant dense<0.000000e+00> : vector<2x128xf32>
    %189 = tpu.matmul %188, %17, %cst_24 {dimension_numbers = #tpu.dot_dimension_numbers<[1], [0], [0], [1], [0, 0, 1, 1], [], []>} : vector<2x32xbf16>, vector<32x128xbf16>, vector<2x128xf32> -> vector<2x128xf32>
    %190 = arith.addf %187, %189 : vector<2x128xf32>
    %191 = math.tanh %190 : vector<2x128xf32>
    %192 = vector.broadcast %8 : vector<1x128xf32> to vector<2x128xf32>
    %193 = arith.mulf %191, %192 : vector<2x128xf32>
    %194 = vector.broadcast %10 : vector<1x128xf32> to vector<2x128xf32>
    %195 = arith.addf %193, %194 : vector<2x128xf32>
    %196 = vector.extract_strided_slice %195 {offsets = [0, 0], sizes = [2, 32], strides = [1, 1]} : vector<2x128xf32> to vector<2x32xf32>
    %197 = vector.extract_strided_slice %195 {offsets = [0, 32], sizes = [2, 32], strides = [1, 1]} : vector<2x128xf32> to vector<2x32xf32>
    %198 = vector.extract_strided_slice %195 {offsets = [0, 64], sizes = [2, 32], strides = [1, 1]} : vector<2x128xf32> to vector<2x32xf32>
    %199 = vector.extract_strided_slice %195 {offsets = [0, 96], sizes = [2, 32], strides = [1, 1]} : vector<2x128xf32> to vector<2x32xf32>
    %200 = arith.mulf %197, %165 : vector<2x32xf32>
    %201 = arith.mulf %196, %198 : vector<2x32xf32>
    %202 = arith.addf %200, %201 : vector<2x32xf32>
    %203 = math.tanh %202 : vector<2x32xf32>
    %204 = arith.mulf %199, %203 : vector<2x32xf32>
    %205 = tpu.concatenate %186, %167 in 1 : vector<2x32xf32>, vector<2x32xf32> -> vector<2x64xf32>
    %206 = arith.truncf %205 : vector<2x64xf32> to vector<2x64xbf16>
    %cst_25 = arith.constant dense<0.000000e+00> : vector<2x128xf32>
    %207 = tpu.matmul %206, %18, %cst_25 {dimension_numbers = #tpu.dot_dimension_numbers<[1], [0], [0], [1], [0, 0, 1, 1], [], []>} : vector<2x64xbf16>, vector<64x128xbf16>, vector<2x128xf32> -> vector<2x128xf32>
    %208 = vector.broadcast %19 : vector<1x128xf32> to vector<2x128xf32>
    %209 = arith.addf %207, %208 : vector<2x128xf32>
    %210 = math.tanh %209 : vector<2x128xf32>
    %211 = vector.broadcast %8 : vector<1x128xf32> to vector<2x128xf32>
    %212 = arith.mulf %210, %211 : vector<2x128xf32>
    %213 = vector.broadcast %10 : vector<1x128xf32> to vector<2x128xf32>
    %214 = arith.addf %212, %213 : vector<2x128xf32>
    %215 = vector.extract_strided_slice %214 {offsets = [0, 0], sizes = [2, 32], strides = [1, 1]} : vector<2x128xf32> to vector<2x32xf32>
    %216 = vector.extract_strided_slice %214 {offsets = [0, 32], sizes = [2, 32], strides = [1, 1]} : vector<2x128xf32> to vector<2x32xf32>
    %217 = vector.extract_strided_slice %214 {offsets = [0, 64], sizes = [2, 32], strides = [1, 1]} : vector<2x128xf32> to vector<2x32xf32>
    %218 = vector.extract_strided_slice %214 {offsets = [0, 96], sizes = [2, 32], strides = [1, 1]} : vector<2x128xf32> to vector<2x32xf32>
    %219 = arith.mulf %216, %184 : vector<2x32xf32>
    %220 = arith.mulf %215, %217 : vector<2x32xf32>
    %221 = arith.addf %219, %220 : vector<2x32xf32>
    %222 = math.tanh %221 : vector<2x32xf32>
    %223 = arith.mulf %218, %222 : vector<2x32xf32>
    %224 = vector.extract_strided_slice %16 {offsets = [12, 0], sizes = [2, 128], strides = [1, 1]} : vector<16x128xf32> to vector<2x128xf32>
    %225 = arith.truncf %204 : vector<2x32xf32> to vector<2x32xbf16>
    %cst_26 = arith.constant dense<0.000000e+00> : vector<2x128xf32>
    %226 = tpu.matmul %225, %17, %cst_26 {dimension_numbers = #tpu.dot_dimension_numbers<[1], [0], [0], [1], [0, 0, 1, 1], [], []>} : vector<2x32xbf16>, vector<32x128xbf16>, vector<2x128xf32> -> vector<2x128xf32>
    %227 = arith.addf %224, %226 : vector<2x128xf32>
    %228 = math.tanh %227 : vector<2x128xf32>
    %229 = vector.broadcast %8 : vector<1x128xf32> to vector<2x128xf32>
    %230 = arith.mulf %228, %229 : vector<2x128xf32>
    %231 = vector.broadcast %10 : vector<1x128xf32> to vector<2x128xf32>
    %232 = arith.addf %230, %231 : vector<2x128xf32>
    %233 = vector.extract_strided_slice %232 {offsets = [0, 0], sizes = [2, 32], strides = [1, 1]} : vector<2x128xf32> to vector<2x32xf32>
    %234 = vector.extract_strided_slice %232 {offsets = [0, 32], sizes = [2, 32], strides = [1, 1]} : vector<2x128xf32> to vector<2x32xf32>
    %235 = vector.extract_strided_slice %232 {offsets = [0, 64], sizes = [2, 32], strides = [1, 1]} : vector<2x128xf32> to vector<2x32xf32>
    %236 = vector.extract_strided_slice %232 {offsets = [0, 96], sizes = [2, 32], strides = [1, 1]} : vector<2x128xf32> to vector<2x32xf32>
    %237 = arith.mulf %234, %202 : vector<2x32xf32>
    %238 = arith.mulf %233, %235 : vector<2x32xf32>
    %239 = arith.addf %237, %238 : vector<2x32xf32>
    %240 = math.tanh %239 : vector<2x32xf32>
    %241 = arith.mulf %236, %240 : vector<2x32xf32>
    %242 = tpu.concatenate %223, %204 in 1 : vector<2x32xf32>, vector<2x32xf32> -> vector<2x64xf32>
    %243 = arith.truncf %242 : vector<2x64xf32> to vector<2x64xbf16>
    %cst_27 = arith.constant dense<0.000000e+00> : vector<2x128xf32>
    %244 = tpu.matmul %243, %18, %cst_27 {dimension_numbers = #tpu.dot_dimension_numbers<[1], [0], [0], [1], [0, 0, 1, 1], [], []>} : vector<2x64xbf16>, vector<64x128xbf16>, vector<2x128xf32> -> vector<2x128xf32>
    %245 = vector.broadcast %19 : vector<1x128xf32> to vector<2x128xf32>
    %246 = arith.addf %244, %245 : vector<2x128xf32>
    %247 = math.tanh %246 : vector<2x128xf32>
    %248 = vector.broadcast %8 : vector<1x128xf32> to vector<2x128xf32>
    %249 = arith.mulf %247, %248 : vector<2x128xf32>
    %250 = vector.broadcast %10 : vector<1x128xf32> to vector<2x128xf32>
    %251 = arith.addf %249, %250 : vector<2x128xf32>
    %252 = vector.extract_strided_slice %251 {offsets = [0, 0], sizes = [2, 32], strides = [1, 1]} : vector<2x128xf32> to vector<2x32xf32>
    %253 = vector.extract_strided_slice %251 {offsets = [0, 32], sizes = [2, 32], strides = [1, 1]} : vector<2x128xf32> to vector<2x32xf32>
    %254 = vector.extract_strided_slice %251 {offsets = [0, 64], sizes = [2, 32], strides = [1, 1]} : vector<2x128xf32> to vector<2x32xf32>
    %255 = vector.extract_strided_slice %251 {offsets = [0, 96], sizes = [2, 32], strides = [1, 1]} : vector<2x128xf32> to vector<2x32xf32>
    %256 = arith.mulf %253, %221 : vector<2x32xf32>
    %257 = arith.mulf %252, %254 : vector<2x32xf32>
    %258 = arith.addf %256, %257 : vector<2x32xf32>
    %259 = math.tanh %258 : vector<2x32xf32>
    %260 = arith.mulf %255, %259 : vector<2x32xf32>
    %261 = vector.extract_strided_slice %16 {offsets = [14, 0], sizes = [2, 128], strides = [1, 1]} : vector<16x128xf32> to vector<2x128xf32>
    %262 = arith.truncf %241 : vector<2x32xf32> to vector<2x32xbf16>
    %cst_28 = arith.constant dense<0.000000e+00> : vector<2x128xf32>
    %263 = tpu.matmul %262, %17, %cst_28 {dimension_numbers = #tpu.dot_dimension_numbers<[1], [0], [0], [1], [0, 0, 1, 1], [], []>} : vector<2x32xbf16>, vector<32x128xbf16>, vector<2x128xf32> -> vector<2x128xf32>
    %264 = arith.addf %261, %263 : vector<2x128xf32>
    %265 = math.tanh %264 : vector<2x128xf32>
    %266 = vector.broadcast %8 : vector<1x128xf32> to vector<2x128xf32>
    %267 = arith.mulf %265, %266 : vector<2x128xf32>
    %268 = vector.broadcast %10 : vector<1x128xf32> to vector<2x128xf32>
    %269 = arith.addf %267, %268 : vector<2x128xf32>
    %270 = vector.extract_strided_slice %269 {offsets = [0, 0], sizes = [2, 32], strides = [1, 1]} : vector<2x128xf32> to vector<2x32xf32>
    %271 = vector.extract_strided_slice %269 {offsets = [0, 32], sizes = [2, 32], strides = [1, 1]} : vector<2x128xf32> to vector<2x32xf32>
    %272 = vector.extract_strided_slice %269 {offsets = [0, 64], sizes = [2, 32], strides = [1, 1]} : vector<2x128xf32> to vector<2x32xf32>
    %273 = vector.extract_strided_slice %269 {offsets = [0, 96], sizes = [2, 32], strides = [1, 1]} : vector<2x128xf32> to vector<2x32xf32>
    %274 = arith.mulf %271, %239 : vector<2x32xf32>
    %275 = arith.mulf %270, %272 : vector<2x32xf32>
    %276 = arith.addf %274, %275 : vector<2x32xf32>
    %277 = math.tanh %276 : vector<2x32xf32>
    %278 = arith.mulf %273, %277 : vector<2x32xf32>
    %279 = tpu.concatenate %260, %241 in 1 : vector<2x32xf32>, vector<2x32xf32> -> vector<2x64xf32>
    %280 = arith.truncf %279 : vector<2x64xf32> to vector<2x64xbf16>
    %cst_29 = arith.constant dense<0.000000e+00> : vector<2x128xf32>
    %281 = tpu.matmul %280, %18, %cst_29 {dimension_numbers = #tpu.dot_dimension_numbers<[1], [0], [0], [1], [0, 0, 1, 1], [], []>} : vector<2x64xbf16>, vector<64x128xbf16>, vector<2x128xf32> -> vector<2x128xf32>
    %282 = vector.broadcast %19 : vector<1x128xf32> to vector<2x128xf32>
    %283 = arith.addf %281, %282 : vector<2x128xf32>
    %284 = math.tanh %283 : vector<2x128xf32>
    %285 = vector.broadcast %8 : vector<1x128xf32> to vector<2x128xf32>
    %286 = arith.mulf %284, %285 : vector<2x128xf32>
    %287 = vector.broadcast %10 : vector<1x128xf32> to vector<2x128xf32>
    %288 = arith.addf %286, %287 : vector<2x128xf32>
    %289 = vector.extract_strided_slice %288 {offsets = [0, 0], sizes = [2, 32], strides = [1, 1]} : vector<2x128xf32> to vector<2x32xf32>
    %290 = vector.extract_strided_slice %288 {offsets = [0, 32], sizes = [2, 32], strides = [1, 1]} : vector<2x128xf32> to vector<2x32xf32>
    %291 = vector.extract_strided_slice %288 {offsets = [0, 64], sizes = [2, 32], strides = [1, 1]} : vector<2x128xf32> to vector<2x32xf32>
    %292 = vector.extract_strided_slice %288 {offsets = [0, 96], sizes = [2, 32], strides = [1, 1]} : vector<2x128xf32> to vector<2x32xf32>
    %293 = arith.mulf %290, %258 : vector<2x32xf32>
    %294 = arith.mulf %289, %291 : vector<2x32xf32>
    %295 = arith.addf %293, %294 : vector<2x32xf32>
    %296 = math.tanh %295 : vector<2x32xf32>
    %297 = arith.mulf %292, %296 : vector<2x32xf32>
    %298 = tpu.concatenate %297, %278 in 1 : vector<2x32xf32>, vector<2x32xf32> -> vector<2x64xf32>
    %299 = arith.truncf %298 : vector<2x64xf32> to vector<2x64xbf16>
    %cst_30 = arith.constant dense<0.000000e+00> : vector<2x128xf32>
    %300 = tpu.matmul %299, %18, %cst_30 {dimension_numbers = #tpu.dot_dimension_numbers<[1], [0], [0], [1], [0, 0, 1, 1], [], []>} : vector<2x64xbf16>, vector<64x128xbf16>, vector<2x128xf32> -> vector<2x128xf32>
    %301 = vector.broadcast %19 : vector<1x128xf32> to vector<2x128xf32>
    %302 = arith.addf %300, %301 : vector<2x128xf32>
    %303 = math.tanh %302 : vector<2x128xf32>
    %304 = vector.broadcast %8 : vector<1x128xf32> to vector<2x128xf32>
    %305 = arith.mulf %303, %304 : vector<2x128xf32>
    %306 = vector.broadcast %10 : vector<1x128xf32> to vector<2x128xf32>
    %307 = arith.addf %305, %306 : vector<2x128xf32>
    %308 = vector.extract_strided_slice %307 {offsets = [0, 0], sizes = [2, 32], strides = [1, 1]} : vector<2x128xf32> to vector<2x32xf32>
    %309 = vector.extract_strided_slice %307 {offsets = [0, 32], sizes = [2, 32], strides = [1, 1]} : vector<2x128xf32> to vector<2x32xf32>
    %310 = vector.extract_strided_slice %307 {offsets = [0, 64], sizes = [2, 32], strides = [1, 1]} : vector<2x128xf32> to vector<2x32xf32>
    %311 = vector.extract_strided_slice %307 {offsets = [0, 96], sizes = [2, 32], strides = [1, 1]} : vector<2x128xf32> to vector<2x32xf32>
    %312 = arith.mulf %309, %295 : vector<2x32xf32>
    %313 = arith.mulf %308, %310 : vector<2x32xf32>
    %314 = arith.addf %312, %313 : vector<2x32xf32>
    %315 = math.tanh %314 : vector<2x32xf32>
    %316 = arith.mulf %311, %315 : vector<2x32xf32>
    %c0_31 = arith.constant 0 : index
    %c0_32 = arith.constant 0 : index
    %317 = vector.load %arg6[%c0_31, %c0_32] : memref<32x1xf32, #tpu.memory_space<vmem>>, vector<32x1xf32>
    %cst_33 = arith.constant dense<0.000000e+00> : vector<2x1xf32>
    %318 = tpu.matmul %316, %317, %cst_33 {dimension_numbers = #tpu.dot_dimension_numbers<[1], [0], [0], [1], [0, 0, 1, 1], [], []>} : vector<2x32xf32>, vector<32x1xf32>, vector<2x1xf32> -> vector<2x1xf32>
    %c0_34 = arith.constant 0 : index
    %c0_35 = arith.constant 0 : index
    %319 = vector.load %arg7[%c0_34, %c0_35] : memref<1x1xf32, #tpu.memory_space<vmem>>, vector<1x1xf32>
    %320 = vector.broadcast %319 : vector<1x1xf32> to vector<2x1xf32>
    %321 = arith.addf %318, %320 : vector<2x1xf32>
    %cst_36 = arith.constant 5.000000e-01 : f32
    %322 = vector.broadcast %cst_36 : f32 to vector<2x1xf32>
    %323 = arith.mulf %322, %321 : vector<2x1xf32>
    %324 = math.tanh %323 : vector<2x1xf32>
    %cst_37 = arith.constant 5.000000e-01 : f32
    %325 = vector.broadcast %cst_37 : f32 to vector<2x1xf32>
    %326 = arith.mulf %325, %324 : vector<2x1xf32>
    %cst_38 = arith.constant 5.000000e-01 : f32
    %327 = vector.broadcast %cst_38 : f32 to vector<2x1xf32>
    %328 = arith.addf %326, %327 : vector<2x1xf32>
    %c0_39 = arith.constant 0 : index
    %c0_40 = arith.constant 0 : index
    %329 = vector.load %arg8[%c0_39, %c0_40] : memref<2x1xf32, #tpu.memory_space<vmem>>, vector<2x1xf32>
    tpu.vector_store %arg8[%c0_39, %c0_40], %328 {strides = array<i32>} : memref<2x1xf32, #tpu.memory_space<vmem>>, vector<2x1xf32>,
    return
  }
}

</mosaic_0001>

<llo_original>
// kernel: fatigue_lstm_forward.1
$region0: #{fatigue_lstm_forward.1}
  #allocation0 [shape = 'u32[]', space=smem, size = 0x4, offset = 0x4, fixed_abs, tag = 'smem constant byte address 0x4 - core index']
  #allocation1 [shape = 'u32[144,128]{1,0:T(1,128)}', space=vmem, size = 0x12000, scoped, tag = 'internal scratch']
  #allocation2 [shape = 'f32[1,1]{1,0:T(1,128)S(1)}', space=vmem, size = 0x200, scoped, tag = 'scoped memory for fatigue_lstm_forward.1']
  %s0 = inlined_call_operand.vmem [shape: bf16[16,12], index: 0, kind: input, shape index: {}]
  %s1 = inlined_call_operand.vmem [shape: bf16[12,128], index: 1, kind: input, shape index: {}]
  %s2 = inlined_call_operand.vmem [shape: bf16[32,128], index: 2, kind: input, shape index: {}]
  %s3 = inlined_call_operand.vmem [shape: f32[1,128], index: 3, kind: input, shape index: {}]
  %s4 = inlined_call_operand.vmem [shape: bf16[64,128], index: 4, kind: input, shape index: {}]
  %s5 = inlined_call_operand.vmem [shape: f32[1,128], index: 5, kind: input, shape index: {}]
  %s6 = inlined_call_operand.vmem [shape: f32[32,1], index: 6, kind: input, shape index: {}]
  %s7 = inlined_call_operand.<no memory space> [shape: f32[1,1], index: 7, kind: input, shape index: {}]
  %s8 = inlined_call_operand.vmem [shape: f32[2,1], index: 8, kind: output, shape index: {}]
  %s9 = sld [smem:[#allocation0]]
  $region42: #{fatigue_lstm_forward.1} parent=0
    _
  %s11 = ssub.s32 1, %s9
  %s12 = scalar_select 0, %s11, %s9
  %v13 = vstv %s7
  %14 = vst [vmem:[#allocation2] sm:$0x1] %v13
  // Predicated region
  $region2: #{fatigue_lstm_forward.1} parent=0 // pred_check
    _
  $region3: #{fatigue_lstm_forward.1} parent=0 // pred_check_branch
    %16 = sbr.rel (0) target = $region5
  $region4: #{fatigue_lstm_forward.1} parent=0 // pred_region
    _
  $region5: #{fatigue_lstm_forward.1} parent=0 // pred_fallthru
    _
  // Predicated region
  $region6: #{fatigue_lstm_forward.1} parent=0 // pred_check
    _
  $region7: #{fatigue_lstm_forward.1} parent=0 // pred_check_branch
    %18 = sbr.rel (0) target = $region9
  $region8: #{fatigue_lstm_forward.1} parent=0 // pred_region
    _
  $region9: #{fatigue_lstm_forward.1} parent=0 // pred_fallthru
    _
  // Predicated region
  $region10: #{fatigue_lstm_forward.1} parent=0 // pred_check
    _
  $region11: #{fatigue_lstm_forward.1} parent=0 // pred_check_branch
    %20 = sbr.rel (0) target = $region13
  $region12: #{fatigue_lstm_forward.1} parent=0 // pred_region
    _
  $region13: #{fatigue_lstm_forward.1} parent=0 // pred_fallthru
    _
  // Predicated region
  $region14: #{fatigue_lstm_forward.1} parent=0 // pred_check
    _
  $region15: #{fatigue_lstm_forward.1} parent=0 // pred_check_branch
    %22 = sbr.rel (0) target = $region17
  $region16: #{fatigue_lstm_forward.1} parent=0 // pred_region
    _
  $region17: #{fatigue_lstm_forward.1} parent=0 // pred_fallthru
    _
  // Predicated region
  $region18: #{fatigue_lstm_forward.1} parent=0 // pred_check
    _
  $region19: #{fatigue_lstm_forward.1} parent=0 // pred_check_branch
    %24 = sbr.rel (0) target = $region21
  $region20: #{fatigue_lstm_forward.1} parent=0 // pred_region
    _
  $region21: #{fatigue_lstm_forward.1} parent=0 // pred_fallthru
    _
  // Predicated region
  $region22: #{fatigue_lstm_forward.1} parent=0 // pred_check
    _
  $region23: #{fatigue_lstm_forward.1} parent=0 // pred_check_branch
    %26 = sbr.rel (0) target = $region25
  $region24: #{fatigue_lstm_forward.1} parent=0 // pred_region
    _
  $region25: #{fatigue_lstm_forward.1} parent=0 // pred_fallthru
    _
  // Predicated region
  $region26: #{fatigue_lstm_forward.1} parent=0 // pred_check
    _
  $region27: #{fatigue_lstm_forward.1} parent=0 // pred_check_branch
    %28 = sbr.rel (0) target = $region29
  $region28: #{fatigue_lstm_forward.1} parent=0 // pred_region
    _
  $region29: #{fatigue_lstm_forward.1} parent=0 // pred_fallthru
    _
  // Predicated region
  $region30: #{fatigue_lstm_forward.1} parent=0 // pred_check
    _
  $region31: #{fatigue_lstm_forward.1} parent=0 // pred_check_branch
    %30 = sbr.rel (0) target = $region33
  $region32: #{fatigue_lstm_forward.1} parent=0 // pred_region
    _
  $region33: #{fatigue_lstm_forward.1} parent=0 // pred_fallthru
    _
  %v32 = vlaneseq
  %v33 = vand.u32 %v32, 127
  %vm34 = vcmp.ge.s32.totalorder %v33, 64
  %vm35 = vcmp.lt.s32.totalorder %v33, 96
  %vm36 = vmand %vm34, %vm35
  %v37 = vsel %vm36, 1.0, 0.5
  %v38 = vsub.f32 1.0, %v37
  %v39 = vld [vmem:[%s0] sm:$0xf]
  %v40 = vld [vmem:[%s0 + $0x4] sm:$0xf]
  %v41 = vld [vmem:[%s1] sm:$0xf]
  %v42 = vld [vmem:[%s1 + $0x4] sm:$0x3]
  %v43 = vld [vmem:[%s3] sm:$0x1]
  %v45 = vlaneseq
  %v46 = vshrl.u32 %v45, 7
  %v47 = vsub.s32 0, %v46
  %v48 = vrot.slane %v43, %v47
  %v52 = vunpack.c.l.b16 %v39
  %v53 = vunpack.c.l.b16 %v40
  %v54 = vpack.c.b16 %v53, %v52
  %v57 = vunpack.c.l.b16 %v41
  %v58 = vunpack.c.l.b16 %v42
  %v59 = vpack.c.b16 %v58, %v57
  %vm60 = vcmask 97280
  %v62 = vsel %vm60, %v54, 0
  %vm64 = vcmask 1045504
  %v66 = vsel %vm64, %v59, 0
  %68 = vmatprep.subr.bf16.mxu0 0
  %69 = vmatpush1.bf16.msra.mxu0 0
  %70 = vmatprep.subr.bf16.mxu0 0
  %71 = vmatpush1.bf16.msra.mxu0 0
  %72 = vmatprep.subr.bf16.mxu0 0
  %73 = vmatpush1.bf16.msra.mxu0 0
  %74 = vmatprep.subr.bf16.mxu0 0
  %75 = vmatpush1.bf16.msra.mxu0 0
  %76 = vmatprep.subr.bf16.mxu0 0
  %77 = vmatpush1.bf16.msra.mxu0 0
  %78 = vmatprep.subr.bf16.mxu0 0
  %79 = vmatpush1.bf16.msra.mxu0 0
  %80 = vmatprep.subr.bf16.mxu0 0
  %81 = vmatpush1.bf16.msra.mxu0 0
  %82 = vmatprep.subr.bf16.mxu0 0
  %83 = vmatpush1.bf16.msra.mxu0 %v66
  %84 = vmatprep.subr.bf16.mxu0 0
  %85 = vmatpush2.bf16.msra.mxu0 0
  %86 = vmatprep.subr.bf16.mxu0 0
  %87 = vmatpush2.bf16.msra.mxu0 0
  %88 = vmatprep.subr.bf16.mxu0 0
  %89 = vmatpush2.bf16.msra.mxu0 0
  %90 = vmatprep.subr.bf16.mxu0 0
  %91 = vmatpush2.bf16.msra.mxu0 0
  %92 = vmatprep.subr.bf16.mxu0 0
  %93 = vmatpush2.bf16.msra.mxu0 0
  %94 = vmatprep.subr.bf16.mxu0 0
  %95 = vmatpush2.bf16.msra.mxu0 0
  %96 = vmatprep.subr.bf16.mxu0 0
  %97 = vmatpush2.bf16.msra.mxu0 0
  %98 = vmatprep.subr.bf16.mxu0 0
  %99 = vmatpush2.bf16.msra.mxu0 0
  %100 = vmatprep.mubr.bf16.mxu0 0
  %101 = vmatmul.mubr.bf16.gmra.mxu0 %v62
  %v102 = vpop.f32.mrf.mxu0
  %v103 = vadd.f32 %v48, %v102
  %v104 = vpop.f32.mrf.mxu0
  %v105 = vpop.f32.mrf.mxu0
  %v106 = vadd.f32 %v48, %v105
  %v107 = vpop.f32.mrf.mxu0
  %108 = vdwg.mxu0
  %v109 = vld [vmem:[%s2] sm:$0xf]
  %v110 = vld [vmem:[%s2 + $0x4] sm:$0xf]
  %v111 = vld [vmem:[%s2 + $0x8] sm:$0xf]
  %v112 = vld [vmem:[%s2 + $0xc] sm:$0xf]
  %v113 = vld [vmem:[%s4] sm:$0xf]
  %v114 = vld [vmem:[%s4 + $0x4] sm:$0xf]
  %v115 = vld [vmem:[%s4 + $0x8] sm:$0xf]
  %v116 = vld [vmem:[%s4 + $0xc] sm:$0xf]
  %v117 = vld [vmem:[%s4 + $0x10] sm:$0xf]
  %v118 = vld [vmem:[%s4 + $0x14] sm:$0xf]
  %v119 = vld [vmem:[%s4 + $0x18] sm:$0xf]
  %v120 = vld [vmem:[%s4 + $0x1c] sm:$0xf]
  %v121 = vld [vmem:[%s5] sm:$0x1]
  %v126 = vunpack.c.l.b16 %v109
  %v127 = vunpack.c.l.b16 %v110
  %v128 = vunpack.c.l.b16 %v111
  %v129 = vunpack.c.l.b16 %v112
  %v130 = vpack.c.b16 %v127, %v126
  %v131 = vpack.c.b16 %v129, %v128
  %vm134 = vcmask 261120
  %v136 = vsel %vm134, 0, 0
  %138 = vmatprep.subr.bf16.mxu0 0
  %139 = vmatpush1.bf16.msra.mxu0 0
  %140 = vmatprep.subr.bf16.mxu0 0
  %141 = vmatpush1.bf16.msra.mxu0 0
  %142 = vmatprep.subr.bf16.mxu0 0
  %143 = vmatpush1.bf16.msra.mxu0 0
  %144 = vmatprep.subr.bf16.mxu0 0
  %145 = vmatpush1.bf16.msra.mxu0 0
  %146 = vmatprep.subr.bf16.mxu0 0
  %147 = vmatpush1.bf16.msra.mxu0 0
  %148 = vmatprep.subr.bf16.mxu0 0
  %149 = vmatpush1.bf16.msra.mxu0 0
  %150 = vmatprep.subr.bf16.mxu0 0
  %151 = vmatpush1.bf16.msra.mxu0 %v131
  %152 = vmatprep.subr.bf16.mxu0 0
  %153 = vmatpush1.bf16.msra.mxu0 %v130
  %154 = vmatprep.subr.bf16.mxu0 0
  %155 = vmatpush2.bf16.msra.mxu0 0
  %156 = vmatprep.subr.bf16.mxu0 0
  %157 = vmatpush2.bf16.msra.mxu0 0
  %158 = vmatprep.subr.bf16.mxu0 0
  %159 = vmatpush2.bf16.msra.mxu0 0
  %160 = vmatprep.subr.bf16.mxu0 0
  %161 = vmatpush2.bf16.msra.mxu0 0
  %162 = vmatprep.subr.bf16.mxu0 0
  %163 = vmatpush2.bf16.msra.mxu0 0
  %164 = vmatprep.subr.bf16.mxu0 0
  %165 = vmatpush2.bf16.msra.mxu0 0
  %166 = vmatprep.subr.bf16.mxu0 0
  %167 = vmatpush2.bf16.msra.mxu0 0
  %168 = vmatprep.subr.bf16.mxu0 0
  %169 = vmatpush2.bf16.msra.mxu0 0
  %170 = vmatprep.mubr.bf16.mxu0 0
  %171 = vmatmul.mubr.bf16.gmra.mxu0 %v136
  %v172 = vpop.f32.mrf.mxu0
  %v173 = vadd.f32 0.0, %v172
  %v174 = vpop.f32.mrf.mxu0
  %v175 = vpop.f32.mrf.mxu0
  %v176 = vpop.f32.mrf.mxu0
  %177 = vdwg.mxu0
  %v178 = vadd.f32 %v103, %v173
  %v179 = vtanh.pop %v178
  %v180 = vmul.f32 %v179, %v37
  %v181 = vadd.f32 %v180, %v38
  %v182 = vmul.f32 %v181, 0.0
  %184 = vrot.lane.b32.xlu0 %v181, 64
  %v185 = vpop.permute.xlu0 %184
  %v187 = vmul.f32 %v181, %v185
  %189 = vrot.lane.b32.xlu0 %v187, 32
  %v190 = vpop.permute.xlu0 %189
  %v192 = vadd.f32 %v182, %v190
  %v193 = vtanh.pop %v192
  %195 = vrot.lane.b32.xlu0 %v193, 64
  %v196 = vpop.permute.xlu0 %195
  %v198 = vmul.f32 %v181, %v196
  %v199 = vpack.c.bf16 %v198, %v198
  %201 = vrot.lane.b32.xlu0 %v199, 32
  %v202 = vpop.permute.xlu0 %201
  %v204 = vsel %vm134, %v202, 0
  %206 = vmatprep.subr.bf16.mxu0 0
  %207 = vmatpush1.bf16.msra.mxu0 0
  %208 = vmatprep.subr.bf16.mxu0 0
  %209 = vmatpush1.bf16.msra.mxu0 0
  %210 = vmatprep.subr.bf16.mxu0 0
  %211 = vmatpush1.bf16.msra.mxu0 0
  %212 = vmatprep.subr.bf16.mxu0 0
  %213 = vmatpush1.bf16.msra.mxu0 0
  %214 = vmatprep.subr.bf16.mxu0 0
  %215 = vmatpush1.bf16.msra.mxu0 0
  %216 = vmatprep.subr.bf16.mxu0 0
  %217 = vmatpush1.bf16.msra.mxu0 0
  %218 = vmatprep.subr.bf16.mxu0 0
  %219 = vmatpush1.bf16.msra.mxu0 %v131
  %220 = vmatprep.subr.bf16.mxu0 0
  %221 = vmatpush1.bf16.msra.mxu0 %v130
  %222 = vmatprep.subr.bf16.mxu0 0
  %223 = vmatpush2.bf16.msra.mxu0 0
  %224 = vmatprep.subr.bf16.mxu0 0
  %225 = vmatpush2.bf16.msra.mxu0 0
  %226 = vmatprep.subr.bf16.mxu0 0
  %227 = vmatpush2.bf16.msra.mxu0 0
  %228 = vmatprep.subr.bf16.mxu0 0
  %229 = vmatpush2.bf16.msra.mxu0 0
  %230 = vmatprep.subr.bf16.mxu0 0
  %231 = vmatpush2.bf16.msra.mxu0 0
  %232 = vmatprep.subr.bf16.mxu0 0
  %233 = vmatpush2.bf16.msra.mxu0 0
  %234 = vmatprep.subr.bf16.mxu0 0
  %235 = vmatpush2.bf16.msra.mxu0 0
  %236 = vmatprep.subr.bf16.mxu0 0
  %237 = vmatpush2.bf16.msra.mxu0 0
  %238 = vmatprep.mubr.bf16.mxu0 0
  %239 = vmatmul.mubr.bf16.gmra.mxu0 %v204
  %v240 = vpop.f32.mrf.mxu0
  %v241 = vadd.f32 0.0, %v240
  %v242 = vpop.f32.mrf.mxu0
  %v243 = vpop.f32.mrf.mxu0
  %v244 = vpop.f32.mrf.mxu0
  %245 = vdwg.mxu0
  %v247 = vrot.slane %v241, 6
  %v249 = vadd.f32 %v103, %v247
  %v250 = vtanh.pop %v249
  %v251 = vmul.f32 %v250, %v37
  %v252 = vadd.f32 %v251, %v38
  %v254 = vrot.slane %v192, 6
  %v256 = vmul.f32 %v252, %v254
  %258 = vrot.lane.b32.xlu0 %v252, 64
  %v259 = vpop.permute.xlu0 %258
  %v261 = vmul.f32 %v252, %v259
  %263 = vrot.lane.b32.xlu0 %v261, 32
  %v264 = vpop.permute.xlu0 %263
  %v266 = vadd.f32 %v256, %v264
  %v267 = vtanh.pop %v266
  %269 = vrot.lane.b32.xlu0 %v267, 64
  %v270 = vpop.permute.xlu0 %269
  %v272 = vmul.f32 %v252, %v270
  %274 = vrot.lane.b32.xlu0 %v198, 64
  %v275 = vpop.permute.xlu0 %274
  %v277 = vsel %vm134, 0.0, %v275
  %v278 = vpack.c.bf16 %v277, %v277
  %v280 = vlaneseq
  %v281 = vshrl.u32 %v280, 7
  %v282 = vsub.s32 0, %v281
  %v283 = vrot.slane %v121, %v282
  %v293 = vunpack.c.l.b16 %v113
  %v294 = vunpack.c.l.b16 %v114
  %v295 = vunpack.c.l.b16 %v115
  %v296 = vunpack.c.l.b16 %v116
  %v297 = vunpack.c.l.b16 %v117
  %v298 = vunpack.c.l.b16 %v118
  %v299 = vunpack.c.l.b16 %v119
  %v300 = vunpack.c.l.b16 %v120
  %v301 = vpack.c.b16 %v294, %v293
  %v302 = vpack.c.b16 %v296, %v295
  %v303 = vpack.c.b16 %v298, %v297
  %v304 = vpack.c.b16 %v300, %v299
  %vm309 = vcmask 523264
  %v311 = vsel %vm309, %v278, 0
  %313 = vmatprep.subr.bf16.mxu0 0
  %314 = vmatpush1.bf16.msra.mxu0 0
  %315 = vmatprep.subr.bf16.mxu0 0
  %316 = vmatpush1.bf16.msra.mxu0 0
  %317 = vmatprep.subr.bf16.mxu0 0
  %318 = vmatpush1.bf16.msra.mxu0 0
  %319 = vmatprep.subr.bf16.mxu0 0
  %320 = vmatpush1.bf16.msra.mxu0 0
  %321 = vmatprep.subr.bf16.mxu0 0
  %322 = vmatpush1.bf16.msra.mxu0 %v304
  %323 = vmatprep.subr.bf16.mxu0 0
  %324 = vmatpush1.bf16.msra.mxu0 %v303
  %325 = vmatprep.subr.bf16.mxu0 0
  %326 = vmatpush1.bf16.msra.mxu0 %v302
  %327 = vmatprep.subr.bf16.mxu0 0
  %328 = vmatpush1.bf16.msra.mxu0 %v301
  %329 = vmatprep.subr.bf16.mxu0 0
  %330 = vmatpush2.bf16.msra.mxu0 0
  %331 = vmatprep.subr.bf16.mxu0 0
  %332 = vmatpush2.bf16.msra.mxu0 0
  %333 = vmatprep.subr.bf16.mxu0 0
  %334 = vmatpush2.bf16.msra.mxu0 0
  %335 = vmatprep.subr.bf16.mxu0 0
  %336 = vmatpush2.bf16.msra.mxu0 0
  %337 = vmatprep.subr.bf16.mxu0 0
  %338 = vmatpush2.bf16.msra.mxu0 0
  %339 = vmatprep.subr.bf16.mxu0 0
  %340 = vmatpush2.bf16.msra.mxu0 0
  %341 = vmatprep.subr.bf16.mxu0 0
  %342 = vmatpush2.bf16.msra.mxu0 0
  %343 = vmatprep.subr.bf16.mxu0 0
  %344 = vmatpush2.bf16.msra.mxu0 0
  %345 = vmatprep.mubr.bf16.mxu0 0
  %346 = vmatmul.mubr.bf16.gmra.mxu0 %v311
  %v347 = vpop.f32.mrf.mxu0
  %v348 = vadd.f32 %v283, %v347
  %v349 = vpop.f32.mrf.mxu0
  %v350 = vpop.f32.mrf.mxu0
  %v351 = vpop.f32.mrf.mxu0
  %352 = vdwg.mxu0
  %v353 = vtanh.pop %v348
  %v354 = vmul.f32 %v353, %v37
  %v355 = vadd.f32 %v354, %v38
  %v356 = vmul.f32 %v355, 0.0
  %358 = vrot.lane.b32.xlu0 %v355, 64
  %v359 = vpop.permute.xlu0 %358
  %v361 = vmul.f32 %v355, %v359
  %363 = vrot.lane.b32.xlu0 %v361, 32
  %v364 = vpop.permute.xlu0 %363
  %v366 = vadd.f32 %v356, %v364
  %v367 = vtanh.pop %v366
  %369 = vrot.lane.b32.xlu0 %v367, 64
  %v370 = vpop.permute.xlu0 %369
  %v372 = vmul.f32 %v355, %v370
  %v373 = vpack.c.bf16 %v272, %v272
  %v375 = vrot.slane %v373, 1
  %376 = vrot.lane.b32.xlu0 %v375, 32
  %v377 = vpop.permute.xlu0 %376
  %v379 = vsel %vm134, %v377, 0
  %381 = vmatprep.subr.bf16.mxu0 0
  %382 = vmatpush1.bf16.msra.mxu0 0
  %383 = vmatprep.subr.bf16.mxu0 0
  %384 = vmatpush1.bf16.msra.mxu0 0
  %385 = vmatprep.subr.bf16.mxu0 0
  %386 = vmatpush1.bf16.msra.mxu0 0
  %387 = vmatprep.subr.bf16.mxu0 0
  %388 = vmatpush1.bf16.msra.mxu0 0
  %389 = vmatprep.subr.bf16.mxu0 0
  %390 = vmatpush1.bf16.msra.mxu0 0
  %391 = vmatprep.subr.bf16.mxu0 0
  %392 = vmatpush1.bf16.msra.mxu0 0
  %393 = vmatprep.subr.bf16.mxu0 0
  %394 = vmatpush1.bf16.msra.mxu0 %v131
  %395 = vmatprep.subr.bf16.mxu0 0
  %396 = vmatpush1.bf16.msra.mxu0 %v130
  %397 = vmatprep.subr.bf16.mxu0 0
  %398 = vmatpush2.bf16.msra.mxu0 0
  %399 = vmatprep.subr.bf16.mxu0 0
  %400 = vmatpush2.bf16.msra.mxu0 0
  %401 = vmatprep.subr.bf16.mxu0 0
  %402 = vmatpush2.bf16.msra.mxu0 0
  %403 = vmatprep.subr.bf16.mxu0 0
  %404 = vmatpush2.bf16.msra.mxu0 0
  %405 = vmatprep.subr.bf16.mxu0 0
  %406 = vmatpush2.bf16.msra.mxu0 0
  %407 = vmatprep.subr.bf16.mxu0 0
  %408 = vmatpush2.bf16.msra.mxu0 0
  %409 = vmatprep.subr.bf16.mxu0 0
  %410 = vmatpush2.bf16.msra.mxu0 0
  %411 = vmatprep.subr.bf16.mxu0 0
  %412 = vmatpush2.bf16.msra.mxu0 0
  %413 = vmatprep.mubr.bf16.mxu0 0
  %414 = vmatmul.mubr.bf16.gmra.mxu0 %v379
  %v415 = vpop.f32.mrf.mxu0
  %v416 = vadd.f32 0.0, %v415
  %v417 = vpop.f32.mrf.mxu0
  %v418 = vpop.f32.mrf.mxu0
  %v419 = vpop.f32.mrf.mxu0
  %420 = vdwg.mxu0
  %v422 = vrot.slane %v416, 4
  %v424 = vadd.f32 %v103, %v422
  %v425 = vtanh.pop %v424
  %v426 = vmul.f32 %v425, %v37
  %v427 = vadd.f32 %v426, %v38
  %v429 = vrot.slane %v266, 6
  %v431 = vmul.f32 %v427, %v429
  %433 = vrot.lane.b32.xlu0 %v427, 64
  %v434 = vpop.permute.xlu0 %433
  %v436 = vmul.f32 %v427, %v434
  %438 = vrot.lane.b32.xlu0 %v436, 32
  %v439 = vpop.permute.xlu0 %438
  %v441 = vadd.f32 %v431, %v439
  %v442 = vtanh.pop %v441
  %444 = vrot.lane.b32.xlu0 %v442, 64
  %v445 = vpop.permute.xlu0 %444
  %v447 = vmul.f32 %v427, %v445
  %449 = vrot.lane.b32.xlu0 %v372, 32
  %v450 = vpop.permute.xlu0 %449
  %v453 = vrot.slane %v272, 2
  %454 = vrot.lane.b32.xlu0 %v453, 64
  %v455 = vpop.permute.xlu0 %454
  %v457 = vsel %vm134, %v450, %v455
  %v458 = vpack.c.bf16 %v457, %v457
  %v460 = vsel %vm309, %v458, 0
  %462 = vmatprep.subr.bf16.mxu0 0
  %463 = vmatpush1.bf16.msra.mxu0 0
  %464 = vmatprep.subr.bf16.mxu0 0
  %465 = vmatpush1.bf16.msra.mxu0 0
  %466 = vmatprep.subr.bf16.mxu0 0
  %467 = vmatpush1.bf16.msra.mxu0 0
  %468 = vmatprep.subr.bf16.mxu0 0
  %469 = vmatpush1.bf16.msra.mxu0 0
  %470 = vmatprep.subr.bf16.mxu0 0
  %471 = vmatpush1.bf16.msra.mxu0 %v304
  %472 = vmatprep.subr.bf16.mxu0 0
  %473 = vmatpush1.bf16.msra.mxu0 %v303
  %474 = vmatprep.subr.bf16.mxu0 0
  %475 = vmatpush1.bf16.msra.mxu0 %v302
  %476 = vmatprep.subr.bf16.mxu0 0
  %477 = vmatpush1.bf16.msra.mxu0 %v301
  %478 = vmatprep.subr.bf16.mxu0 0
  %479 = vmatpush2.bf16.msra.mxu0 0
  %480 = vmatprep.subr.bf16.mxu0 0
  %481 = vmatpush2.bf16.msra.mxu0 0
  %482 = vmatprep.subr.bf16.mxu0 0
  %483 = vmatpush2.bf16.msra.mxu0 0
  %484 = vmatprep.subr.bf16.mxu0 0
  %485 = vmatpush2.bf16.msra.mxu0 0
  %486 = vmatprep.subr.bf16.mxu0 0
  %487 = vmatpush2.bf16.msra.mxu0 0
  %488 = vmatprep.subr.bf16.mxu0 0
  %489 = vmatpush2.bf16.msra.mxu0 0
  %490 = vmatprep.subr.bf16.mxu0 0
  %491 = vmatpush2.bf16.msra.mxu0 0
  %492 = vmatprep.subr.bf16.mxu0 0
  %493 = vmatpush2.bf16.msra.mxu0 0
  %494 = vmatprep.mubr.bf16.mxu0 0
  %495 = vmatmul.mubr.bf16.gmra.mxu0 %v460
  %v496 = vpop.f32.mrf.mxu0
  %v497 = vadd.f32 %v283, %v496
  %v498 = vpop.f32.mrf.mxu0
  %v499 = vpop.f32.mrf.mxu0
  %v500 = vpop.f32.mrf.mxu0
  %501 = vdwg.mxu0
  %v502 = vtanh.pop %v497
  %v503 = vmul.f32 %v502, %v37
  %v504 = vadd.f32 %v503, %v38
  %v505 = vmul.f32 %v504, %v366
  %507 = vrot.lane.b32.xlu0 %v504, 64
  %v508 = vpop.permute.xlu0 %507
  %v510 = vmul.f32 %v504, %v508
  %512 = vrot.lane.b32.xlu0 %v510, 32
  %v513 = vpop.permute.xlu0 %512
  %v515 = vadd.f32 %v505, %v513
  %v516 = vtanh.pop %v515
  %518 = vrot.lane.b32.xlu0 %v516, 64
  %v519 = vpop.permute.xlu0 %518
  %v521 = vmul.f32 %v504, %v519
  %v522 = vpack.c.bf16 %v447, %v447
  %v524 = vrot.slane %v522, 2
  %525 = vrot.lane.b32.xlu0 %v524, 32
  %v526 = vpop.permute.xlu0 %525
  %v528 = vsel %vm134, %v526, 0
  %530 = vmatprep.subr.bf16.mxu0 0
  %531 = vmatpush1.bf16.msra.mxu0 0
  %532 = vmatprep.subr.bf16.mxu0 0
  %533 = vmatpush1.bf16.msra.mxu0 0
  %534 = vmatprep.subr.bf16.mxu0 0
  %535 = vmatpush1.bf16.msra.mxu0 0
  %536 = vmatprep.subr.bf16.mxu0 0
  %537 = vmatpush1.bf16.msra.mxu0 0
  %538 = vmatprep.subr.bf16.mxu0 0
  %539 = vmatpush1.bf16.msra.mxu0 0
  %540 = vmatprep.subr.bf16.mxu0 0
  %541 = vmatpush1.bf16.msra.mxu0 0
  %542 = vmatprep.subr.bf16.mxu0 0
  %543 = vmatpush1.bf16.msra.mxu0 %v131
  %544 = vmatprep.subr.bf16.mxu0 0
  %545 = vmatpush1.bf16.msra.mxu0 %v130
  %546 = vmatprep.subr.bf16.mxu0 0
  %547 = vmatpush2.bf16.msra.mxu0 0
  %548 = vmatprep.subr.bf16.mxu0 0
  %549 = vmatpush2.bf16.msra.mxu0 0
  %550 = vmatprep.subr.bf16.mxu0 0
  %551 = vmatpush2.bf16.msra.mxu0 0
  %552 = vmatprep.subr.bf16.mxu0 0
  %553 = vmatpush2.bf16.msra.mxu0 0
  %554 = vmatprep.subr.bf16.mxu0 0
  %555 = vmatpush2.bf16.msra.mxu0 0
  %556 = vmatprep.subr.bf16.mxu0 0
  %557 = vmatpush2.bf16.msra.mxu0 0
  %558 = vmatprep.subr.bf16.mxu0 0
  %559 = vmatpush2.bf16.msra.mxu0 0
  %560 = vmatprep.subr.bf16.mxu0 0
  %561 = vmatpush2.bf16.msra.mxu0 0
  %562 = vmatprep.mubr.bf16.mxu0 0
  %563 = vmatmul.mubr.bf16.gmra.mxu0 %v528
  %v564 = vpop.f32.mrf.mxu0
  %v565 = vadd.f32 0.0, %v564
  %v566 = vpop.f32.mrf.mxu0
  %v567 = vpop.f32.mrf.mxu0
  %v568 = vpop.f32.mrf.mxu0
  %569 = vdwg.mxu0
  %v571 = vrot.slane %v565, 2
  %v573 = vadd.f32 %v103, %v571
  %v574 = vtanh.pop %v573
  %v575 = vmul.f32 %v574, %v37
  %v576 = vadd.f32 %v575, %v38
  %v578 = vrot.slane %v441, 6
  %v580 = vmul.f32 %v576, %v578
  %582 = vrot.lane.b32.xlu0 %v576, 64
  %v583 = vpop.permute.xlu0 %582
  %v585 = vmul.f32 %v576, %v583
  %587 = vrot.lane.b32.xlu0 %v585, 32
  %v588 = vpop.permute.xlu0 %587
  %v590 = vadd.f32 %v580, %v588
  %v591 = vtanh.pop %v590
  %593 = vrot.lane.b32.xlu0 %v591, 64
  %v594 = vpop.permute.xlu0 %593
  %v596 = vmul.f32 %v576, %v594
  %598 = vrot.lane.b32.xlu0 %v521, 32
  %v599 = vpop.permute.xlu0 %598
  %v602 = vrot.slane %v447, 4
  %603 = vrot.lane.b32.xlu0 %v602, 64
  %v604 = vpop.permute.xlu0 %603
  %v606 = vsel %vm134, %v599, %v604
  %v607 = vpack.c.bf16 %v606, %v606
  %v609 = vsel %vm309, %v607, 0
  %611 = vmatprep.subr.bf16.mxu0 0
  %612 = vmatpush1.bf16.msra.mxu0 0
  %613 = vmatprep.subr.bf16.mxu0 0
  %614 = vmatpush1.bf16.msra.mxu0 0
  %615 = vmatprep.subr.bf16.mxu0 0
  %616 = vmatpush1.bf16.msra.mxu0 0
  %617 = vmatprep.subr.bf16.mxu0 0
  %618 = vmatpush1.bf16.msra.mxu0 0
  %619 = vmatprep.subr.bf16.mxu0 0
  %620 = vmatpush1.bf16.msra.mxu0 %v304
  %621 = vmatprep.subr.bf16.mxu0 0
  %622 = vmatpush1.bf16.msra.mxu0 %v303
  %623 = vmatprep.subr.bf16.mxu0 0
  %624 = vmatpush1.bf16.msra.mxu0 %v302
  %625 = vmatprep.subr.bf16.mxu0 0
  %626 = vmatpush1.bf16.msra.mxu0 %v301
  %627 = vmatprep.subr.bf16.mxu0 0
  %628 = vmatpush2.bf16.msra.mxu0 0
  %629 = vmatprep.subr.bf16.mxu0 0
  %630 = vmatpush2.bf16.msra.mxu0 0
  %631 = vmatprep.subr.bf16.mxu0 0
  %632 = vmatpush2.bf16.msra.mxu0 0
  %633 = vmatprep.subr.bf16.mxu0 0
  %634 = vmatpush2.bf16.msra.mxu0 0
  %635 = vmatprep.subr.bf16.mxu0 0
  %636 = vmatpush2.bf16.msra.mxu0 0
  %637 = vmatprep.subr.bf16.mxu0 0
  %638 = vmatpush2.bf16.msra.mxu0 0
  %639 = vmatprep.subr.bf16.mxu0 0
  %640 = vmatpush2.bf16.msra.mxu0 0
  %641 = vmatprep.subr.bf16.mxu0 0
  %642 = vmatpush2.bf16.msra.mxu0 0
  %643 = vmatprep.mubr.bf16.mxu0 0
  %644 = vmatmul.mubr.bf16.gmra.mxu0 %v609
  %v645 = vpop.f32.mrf.mxu0
  %v646 = vadd.f32 %v283, %v645
  %v647 = vpop.f32.mrf.mxu0
  %v648 = vpop.f32.mrf.mxu0
  %v649 = vpop.f32.mrf.mxu0
  %650 = vdwg.mxu0
  %v651 = vtanh.pop %v646
  %v652 = vmul.f32 %v651, %v37
  %v653 = vadd.f32 %v652, %v38
  %v654 = vmul.f32 %v653, %v515
  %656 = vrot.lane.b32.xlu0 %v653, 64
  %v657 = vpop.permute.xlu0 %656
  %v659 = vmul.f32 %v653, %v657
  %661 = vrot.lane.b32.xlu0 %v659, 32
  %v662 = vpop.permute.xlu0 %661
  %v664 = vadd.f32 %v654, %v662
  %v665 = vtanh.pop %v664
  %667 = vrot.lane.b32.xlu0 %v665, 64
  %v668 = vpop.permute.xlu0 %667
  %v670 = vmul.f32 %v653, %v668
  %v671 = vpack.c.bf16 %v596, %v596
  %v673 = vrot.slane %v671, 3
  %674 = vrot.lane.b32.xlu0 %v673, 32
  %v675 = vpop.permute.xlu0 %674
  %v677 = vsel %vm134, %v675, 0
  %679 = vmatprep.subr.bf16.mxu0 0
  %680 = vmatpush1.bf16.msra.mxu0 0
  %681 = vmatprep.subr.bf16.mxu0 0
  %682 = vmatpush1.bf16.msra.mxu0 0
  %683 = vmatprep.subr.bf16.mxu0 0
  %684 = vmatpush1.bf16.msra.mxu0 0
  %685 = vmatprep.subr.bf16.mxu0 0
  %686 = vmatpush1.bf16.msra.mxu0 0
  %687 = vmatprep.subr.bf16.mxu0 0
  %688 = vmatpush1.bf16.msra.mxu0 0
  %689 = vmatprep.subr.bf16.mxu0 0
  %690 = vmatpush1.bf16.msra.mxu0 0
  %691 = vmatprep.subr.bf16.mxu0 0
  %692 = vmatpush1.bf16.msra.mxu0 %v131
  %693 = vmatprep.subr.bf16.mxu0 0
  %694 = vmatpush1.bf16.msra.mxu0 %v130
  %695 = vmatprep.subr.bf16.mxu0 0
  %696 = vmatpush2.bf16.msra.mxu0 0
  %697 = vmatprep.subr.bf16.mxu0 0
  %698 = vmatpush2.bf16.msra.mxu0 0
  %699 = vmatprep.subr.bf16.mxu0 0
  %700 = vmatpush2.bf16.msra.mxu0 0
  %701 = vmatprep.subr.bf16.mxu0 0
  %702 = vmatpush2.bf16.msra.mxu0 0
  %703 = vmatprep.subr.bf16.mxu0 0
  %704 = vmatpush2.bf16.msra.mxu0 0
  %705 = vmatprep.subr.bf16.mxu0 0
  %706 = vmatpush2.bf16.msra.mxu0 0
  %707 = vmatprep.subr.bf16.mxu0 0
  %708 = vmatpush2.bf16.msra.mxu0 0
  %709 = vmatprep.subr.bf16.mxu0 0
  %710 = vmatpush2.bf16.msra.mxu0 0
  %711 = vmatprep.mubr.bf16.mxu0 0
  %712 = vmatmul.mubr.bf16.gmra.mxu0 %v677
  %v713 = vpop.f32.mrf.mxu0
  %v714 = vadd.f32 0.0, %v713
  %v715 = vpop.f32.mrf.mxu0
  %v716 = vpop.f32.mrf.mxu0
  %v717 = vpop.f32.mrf.mxu0
  %718 = vdwg.mxu0
  %v719 = vadd.f32 %v106, %v714
  %v720 = vtanh.pop %v719
  %v721 = vmul.f32 %v720, %v37
  %v722 = vadd.f32 %v721, %v38
  %v724 = vrot.slane %v590, 6
  %v726 = vmul.f32 %v722, %v724
  %728 = vrot.lane.b32.xlu0 %v722, 64
  %v729 = vpop.permute.xlu0 %728
  %v731 = vmul.f32 %v722, %v729
  %733 = vrot.lane.b32.xlu0 %v731, 32
  %v734 = vpop.permute.xlu0 %733
  %v736 = vadd.f32 %v726, %v734
  %v737 = vtanh.pop %v736
  %739 = vrot.lane.b32.xlu0 %v737, 64
  %v740 = vpop.permute.xlu0 %739
  %v742 = vmul.f32 %v722, %v740
  %744 = vrot.lane.b32.xlu0 %v670, 32
  %v745 = vpop.permute.xlu0 %744
  %v748 = vrot.slane %v596, 6
  %749 = vrot.lane.b32.xlu0 %v748, 64
  %v750 = vpop.permute.xlu0 %749
  %v752 = vsel %vm134, %v745, %v750
  %v753 = vpack.c.bf16 %v752, %v752
  %v755 = vsel %vm309, %v753, 0
  %757 = vmatprep.subr.bf16.mxu0 0
  %758 = vmatpush1.bf16.msra.mxu0 0
  %759 = vmatprep.subr.bf16.mxu0 0
  %760 = vmatpush1.bf16.msra.mxu0 0
  %761 = vmatprep.subr.bf16.mxu0 0
  %762 = vmatpush1.bf16.msra.mxu0 0
  %763 = vmatprep.subr.bf16.mxu0 0
  %764 = vmatpush1.bf16.msra.mxu0 0
  %765 = vmatprep.subr.bf16.mxu0 0
  %766 = vmatpush1.bf16.msra.mxu0 %v304
  %767 = vmatprep.subr.bf16.mxu0 0
  %768 = vmatpush1.bf16.msra.mxu0 %v303
  %769 = vmatprep.subr.bf16.mxu0 0
  %770 = vmatpush1.bf16.msra.mxu0 %v302
  %771 = vmatprep.subr.bf16.mxu0 0
  %772 = vmatpush1.bf16.msra.mxu0 %v301
  %773 = vmatprep.subr.bf16.mxu0 0
  %774 = vmatpush2.bf16.msra.mxu0 0
  %775 = vmatprep.subr.bf16.mxu0 0
  %776 = vmatpush2.bf16.msra.mxu0 0
  %777 = vmatprep.subr.bf16.mxu0 0
  %778 = vmatpush2.bf16.msra.mxu0 0
  %779 = vmatprep.subr.bf16.mxu0 0
  %780 = vmatpush2.bf16.msra.mxu0 0
  %781 = vmatprep.subr.bf16.mxu0 0
  %782 = vmatpush2.bf16.msra.mxu0 0
  %783 = vmatprep.subr.bf16.mxu0 0
  %784 = vmatpush2.bf16.msra.mxu0 0
  %785 = vmatprep.subr.bf16.mxu0 0
  %786 = vmatpush2.bf16.msra.mxu0 0
  %787 = vmatprep.subr.bf16.mxu0 0
  %788 = vmatpush2.bf16.msra.mxu0 0
  %789 = vmatprep.mubr.bf16.mxu0 0
  %790 = vmatmul.mubr.bf16.gmra.mxu0 %v755
  %v791 = vpop.f32.mrf.mxu0
  %v792 = vadd.f32 %v283, %v791
  %v793 = vpop.f32.mrf.mxu0
  %v794 = vpop.f32.mrf.mxu0
  %v795 = vpop.f32.mrf.mxu0
  %796 = vdwg.mxu0
  %v797 = vtanh.pop %v792
  %v798 = vmul.f32 %v797, %v37
  %v799 = vadd.f32 %v798, %v38
  %v800 = vmul.f32 %v799, %v664
  %802 = vrot.lane.b32.xlu0 %v799, 64
  %v803 = vpop.permute.xlu0 %802
  %v805 = vmul.f32 %v799, %v803
  %807 = vrot.lane.b32.xlu0 %v805, 32
  %v808 = vpop.permute.xlu0 %807
  %v810 = vadd.f32 %v800, %v808
  %v811 = vtanh.pop %v810
  %813 = vrot.lane.b32.xlu0 %v811, 64
  %v814 = vpop.permute.xlu0 %813
  %v816 = vmul.f32 %v799, %v814
  %v817 = vpack.c.bf16 %v742, %v742
  %819 = vrot.lane.b32.xlu0 %v817, 32
  %v820 = vpop.permute.xlu0 %819
  %v822 = vsel %vm134, %v820, 0
  %824 = vmatprep.subr.bf16.mxu0 0
  %825 = vmatpush1.bf16.msra.mxu0 0
  %826 = vmatprep.subr.bf16.mxu0 0
  %827 = vmatpush1.bf16.msra.mxu0 0
  %828 = vmatprep.subr.bf16.mxu0 0
  %829 = vmatpush1.bf16.msra.mxu0 0
  %830 = vmatprep.subr.bf16.mxu0 0
  %831 = vmatpush1.bf16.msra.mxu0 0
  %832 = vmatprep.subr.bf16.mxu0 0
  %833 = vmatpush1.bf16.msra.mxu0 0
  %834 = vmatprep.subr.bf16.mxu0 0
  %835 = vmatpush1.bf16.msra.mxu0 0
  %836 = vmatprep.subr.bf16.mxu0 0
  %837 = vmatpush1.bf16.msra.mxu0 %v131
  %838 = vmatprep.subr.bf16.mxu0 0
  %839 = vmatpush1.bf16.msra.mxu0 %v130
  %840 = vmatprep.subr.bf16.mxu0 0
  %841 = vmatpush2.bf16.msra.mxu0 0
  %842 = vmatprep.subr.bf16.mxu0 0
  %843 = vmatpush2.bf16.msra.mxu0 0
  %844 = vmatprep.subr.bf16.mxu0 0
  %845 = vmatpush2.bf16.msra.mxu0 0
  %846 = vmatprep.subr.bf16.mxu0 0
  %847 = vmatpush2.bf16.msra.mxu0 0
  %848 = vmatprep.subr.bf16.mxu0 0
  %849 = vmatpush2.bf16.msra.mxu0 0
  %850 = vmatprep.subr.bf16.mxu0 0
  %851 = vmatpush2.bf16.msra.mxu0 0
  %852 = vmatprep.subr.bf16.mxu0 0
  %853 = vmatpush2.bf16.msra.mxu0 0
  %854 = vmatprep.subr.bf16.mxu0 0
  %855 = vmatpush2.bf16.msra.mxu0 0
  %856 = vmatprep.mubr.bf16.mxu0 0
  %857 = vmatmul.mubr.bf16.gmra.mxu0 %v822
  %v858 = vpop.f32.mrf.mxu0
  %v859 = vadd.f32 0.0, %v858
  %v860 = vpop.f32.mrf.mxu0
  %v861 = vpop.f32.mrf.mxu0
  %v862 = vpop.f32.mrf.mxu0
  %863 = vdwg.mxu0
  %v865 = vrot.slane %v859, 6
  %v867 = vadd.f32 %v106, %v865
  %v868 = vtanh.pop %v867
  %v869 = vmul.f32 %v868, %v37
  %v870 = vadd.f32 %v869, %v38
  %v872 = vrot.slane %v736, 6
  %v874 = vmul.f32 %v870, %v872
  %876 = vrot.lane.b32.xlu0 %v870, 64
  %v877 = vpop.permute.xlu0 %876
  %v879 = vmul.f32 %v870, %v877
  %881 = vrot.lane.b32.xlu0 %v879, 32
  %v882 = vpop.permute.xlu0 %881
  %v884 = vadd.f32 %v874, %v882
  %v885 = vtanh.pop %v884
  %887 = vrot.lane.b32.xlu0 %v885, 64
  %v888 = vpop.permute.xlu0 %887
  %v890 = vmul.f32 %v870, %v888
  %892 = vrot.lane.b32.xlu0 %v816, 32
  %v893 = vpop.permute.xlu0 %892
  %896 = vrot.lane.b32.xlu0 %v742, 64
  %v897 = vpop.permute.xlu0 %896
  %v899 = vsel %vm134, %v893, %v897
  %v900 = vpack.c.bf16 %v899, %v899
  %v902 = vsel %vm309, %v900, 0
  %904 = vmatprep.subr.bf16.mxu0 0
  %905 = vmatpush1.bf16.msra.mxu0 0
  %906 = vmatprep.subr.bf16.mxu0 0
  %907 = vmatpush1.bf16.msra.mxu0 0
  %908 = vmatprep.subr.bf16.mxu0 0
  %909 = vmatpush1.bf16.msra.mxu0 0
  %910 = vmatprep.subr.bf16.mxu0 0
  %911 = vmatpush1.bf16.msra.mxu0 0
  %912 = vmatprep.subr.bf16.mxu0 0
  %913 = vmatpush1.bf16.msra.mxu0 %v304
  %914 = vmatprep.subr.bf16.mxu0 0
  %915 = vmatpush1.bf16.msra.mxu0 %v303
  %916 = vmatprep.subr.bf16.mxu0 0
  %917 = vmatpush1.bf16.msra.mxu0 %v302
  %918 = vmatprep.subr.bf16.mxu0 0
  %919 = vmatpush1.bf16.msra.mxu0 %v301
  %920 = vmatprep.subr.bf16.mxu0 0
  %921 = vmatpush2.bf16.msra.mxu0 0
  %922 = vmatprep.subr.bf16.mxu0 0
  %923 = vmatpush2.bf16.msra.mxu0 0
  %924 = vmatprep.subr.bf16.mxu0 0
  %925 = vmatpush2.bf16.msra.mxu0 0
  %926 = vmatprep.subr.bf16.mxu0 0
  %927 = vmatpush2.bf16.msra.mxu0 0
  %928 = vmatprep.subr.bf16.mxu0 0
  %929 = vmatpush2.bf16.msra.mxu0 0
  %930 = vmatprep.subr.bf16.mxu0 0
  %931 = vmatpush2.bf16.msra.mxu0 0
  %932 = vmatprep.subr.bf16.mxu0 0
  %933 = vmatpush2.bf16.msra.mxu0 0
  %934 = vmatprep.subr.bf16.mxu0 0
  %935 = vmatpush2.bf16.msra.mxu0 0
  %936 = vmatprep.mubr.bf16.mxu0 0
  %937 = vmatmul.mubr.bf16.gmra.mxu0 %v902
  %v938 = vpop.f32.mrf.mxu0
  %v939 = vadd.f32 %v283, %v938
  %v940 = vpop.f32.mrf.mxu0
  %v941 = vpop.f32.mrf.mxu0
  %v942 = vpop.f32.mrf.mxu0
  %943 = vdwg.mxu0
  %v944 = vtanh.pop %v939
  %v945 = vmul.f32 %v944, %v37
  %v946 = vadd.f32 %v945, %v38
  %v947 = vmul.f32 %v946, %v810
  %949 = vrot.lane.b32.xlu0 %v946, 64
  %v950 = vpop.permute.xlu0 %949
  %v952 = vmul.f32 %v946, %v950
  %954 = vrot.lane.b32.xlu0 %v952, 32
  %v955 = vpop.permute.xlu0 %954
  %v957 = vadd.f32 %v947, %v955
  %v958 = vtanh.pop %v957
  %960 = vrot.lane.b32.xlu0 %v958, 64
  %v961 = vpop.permute.xlu0 %960
  %v963 = vmul.f32 %v946, %v961
  %v964 = vpack.c.bf16 %v890, %v890
  %v966 = vrot.slane %v964, 1
  %967 = vrot.lane.b32.xlu0 %v966, 32
  %v968 = vpop.permute.xlu0 %967
  %v970 = vsel %vm134, %v968, 0
  %972 = vmatprep.subr.bf16.mxu0 0
  %973 = vmatpush1.bf16.msra.mxu0 0
  %974 = vmatprep.subr.bf16.mxu0 0
  %975 = vmatpush1.bf16.msra.mxu0 0
  %976 = vmatprep.subr.bf16.mxu0 0
  %977 = vmatpush1.bf16.msra.mxu0 0
  %978 = vmatprep.subr.bf16.mxu0 0
  %979 = vmatpush1.bf16.msra.mxu0 0
  %980 = vmatprep.subr.bf16.mxu0 0
  %981 = vmatpush1.bf16.msra.mxu0 0
  %982 = vmatprep.subr.bf16.mxu0 0
  %983 = vmatpush1.bf16.msra.mxu0 0
  %984 = vmatprep.subr.bf16.mxu0 0
  %985 = vmatpush1.bf16.msra.mxu0 %v131
  %986 = vmatprep.subr.bf16.mxu0 0
  %987 = vmatpush1.bf16.msra.mxu0 %v130
  %988 = vmatprep.subr.bf16.mxu0 0
  %989 = vmatpush2.bf16.msra.mxu0 0
  %990 = vmatprep.subr.bf16.mxu0 0
  %991 = vmatpush2.bf16.msra.mxu0 0
  %992 = vmatprep.subr.bf16.mxu0 0
  %993 = vmatpush2.bf16.msra.mxu0 0
  %994 = vmatprep.subr.bf16.mxu0 0
  %995 = vmatpush2.bf16.msra.mxu0 0
  %996 = vmatprep.subr.bf16.mxu0 0
  %997 = vmatpush2.bf16.msra.mxu0 0
  %998 = vmatprep.subr.bf16.mxu0 0
  %999 = vmatpush2.bf16.msra.mxu0 0
  %1000 = vmatprep.subr.bf16.mxu0 0
  %1001 = vmatpush2.bf16.msra.mxu0 0
  %1002 = vmatprep.subr.bf16.mxu0 0
  %1003 = vmatpush2.bf16.msra.mxu0 0
  %1004 = vmatprep.mubr.bf16.mxu0 0
  %1005 = vmatmul.mubr.bf16.gmra.mxu0 %v970
  %v1006 = vpop.f32.mrf.mxu0
  %v1007 = vadd.f32 0.0, %v1006
  %v1008 = vpop.f32.mrf.mxu0
  %v1009 = vpop.f32.mrf.mxu0
  %v1010 = vpop.f32.mrf.mxu0
  %1011 = vdwg.mxu0
  %v1013 = vrot.slane %v1007, 4
  %v1015 = vadd.f32 %v106, %v1013
  %v1016 = vtanh.pop %v1015
  %v1017 = vmul.f32 %v1016, %v37
  %v1018 = vadd.f32 %v1017, %v38
  %v1020 = vrot.slane %v884, 6
  %v1022 = vmul.f32 %v1018, %v1020
  %1024 = vrot.lane.b32.xlu0 %v1018, 64
  %v1025 = vpop.permute.xlu0 %1024
  %v1027 = vmul.f32 %v1018, %v1025
  %1029 = vrot.lane.b32.xlu0 %v1027, 32
  %v1030 = vpop.permute.xlu0 %1029
  %v1032 = vadd.f32 %v1022, %v1030
  %v1033 = vtanh.pop %v1032
  %1035 = vrot.lane.b32.xlu0 %v1033, 64
  %v1036 = vpop.permute.xlu0 %1035
  %v1038 = vmul.f32 %v1018, %v1036
  %1040 = vrot.lane.b32.xlu0 %v963, 32
  %v1041 = vpop.permute.xlu0 %1040
  %v1044 = vrot.slane %v890, 2
  %1045 = vrot.lane.b32.xlu0 %v1044, 64
  %v1046 = vpop.permute.xlu0 %1045
  %v1048 = vsel %vm134, %v1041, %v1046
  %v1049 = vpack.c.bf16 %v1048, %v1048
  %v1051 = vsel %vm309, %v1049, 0
  %1053 = vmatprep.subr.bf16.mxu0 0
  %1054 = vmatpush1.bf16.msra.mxu0 0
  %1055 = vmatprep.subr.bf16.mxu0 0
  %1056 = vmatpush1.bf16.msra.mxu0 0
  %1057 = vmatprep.subr.bf16.mxu0 0
  %1058 = vmatpush1.bf16.msra.mxu0 0
  %1059 = vmatprep.subr.bf16.mxu0 0
  %1060 = vmatpush1.bf16.msra.mxu0 0
  %1061 = vmatprep.subr.bf16.mxu0 0
  %1062 = vmatpush1.bf16.msra.mxu0 %v304
  %1063 = vmatprep.subr.bf16.mxu0 0
  %1064 = vmatpush1.bf16.msra.mxu0 %v303
  %1065 = vmatprep.subr.bf16.mxu0 0
  %1066 = vmatpush1.bf16.msra.mxu0 %v302
  %1067 = vmatprep.subr.bf16.mxu0 0
  %1068 = vmatpush1.bf16.msra.mxu0 %v301
  %1069 = vmatprep.subr.bf16.mxu0 0
  %1070 = vmatpush2.bf16.msra.mxu0 0
  %1071 = vmatprep.subr.bf16.mxu0 0
  %1072 = vmatpush2.bf16.msra.mxu0 0
  %1073 = vmatprep.subr.bf16.mxu0 0
  %1074 = vmatpush2.bf16.msra.mxu0 0
  %1075 = vmatprep.subr.bf16.mxu0 0
  %1076 = vmatpush2.bf16.msra.mxu0 0
  %1077 = vmatprep.subr.bf16.mxu0 0
  %1078 = vmatpush2.bf16.msra.mxu0 0
  %1079 = vmatprep.subr.bf16.mxu0 0
  %1080 = vmatpush2.bf16.msra.mxu0 0
  %1081 = vmatprep.subr.bf16.mxu0 0
  %1082 = vmatpush2.bf16.msra.mxu0 0
  %1083 = vmatprep.subr.bf16.mxu0 0
  %1084 = vmatpush2.bf16.msra.mxu0 0
  %1085 = vmatprep.mubr.bf16.mxu0 0
  %1086 = vmatmul.mubr.bf16.gmra.mxu0 %v1051
  %v1087 = vpop.f32.mrf.mxu0
  %v1088 = vadd.f32 %v283, %v1087
  %v1089 = vpop.f32.mrf.mxu0
  %v1090 = vpop.f32.mrf.mxu0
  %v1091 = vpop.f32.mrf.mxu0
  %1092 = vdwg.mxu0
  %v1093 = vtanh.pop %v1088
  %v1094 = vmul.f32 %v1093, %v37
  %v1095 = vadd.f32 %v1094, %v38
  %v1096 = vmul.f32 %v1095, %v957
  %1098 = vrot.lane.b32.xlu0 %v1095, 64
  %v1099 = vpop.permute.xlu0 %1098
  %v1101 = vmul.f32 %v1095, %v1099
  %1103 = vrot.lane.b32.xlu0 %v1101, 32
  %v1104 = vpop.permute.xlu0 %1103
  %v1106 = vadd.f32 %v1096, %v1104
  %v1107 = vtanh.pop %v1106
  %1109 = vrot.lane.b32.xlu0 %v1107, 64
  %v1110 = vpop.permute.xlu0 %1109
  %v1112 = vmul.f32 %v1095, %v1110
  %v1113 = vpack.c.bf16 %v1038, %v1038
  %v1115 = vrot.slane %v1113, 2
  %1116 = vrot.lane.b32.xlu0 %v1115, 32
  %v1117 = vpop.permute.xlu0 %1116
  %v1119 = vsel %vm134, %v1117, 0
  %1121 = vmatprep.subr.bf16.mxu0 0
  %1122 = vmatpush1.bf16.msra.mxu0 0
  %1123 = vmatprep.subr.bf16.mxu0 0
  %1124 = vmatpush1.bf16.msra.mxu0 0
  %1125 = vmatprep.subr.bf16.mxu0 0
  %1126 = vmatpush1.bf16.msra.mxu0 0
  %1127 = vmatprep.subr.bf16.mxu0 0
  %1128 = vmatpush1.bf16.msra.mxu0 0
  %1129 = vmatprep.subr.bf16.mxu0 0
  %1130 = vmatpush1.bf16.msra.mxu0 0
  %1131 = vmatprep.subr.bf16.mxu0 0
  %1132 = vmatpush1.bf16.msra.mxu0 0
  %1133 = vmatprep.subr.bf16.mxu0 0
  %1134 = vmatpush1.bf16.msra.mxu0 %v131
  %1135 = vmatprep.subr.bf16.mxu0 0
  %1136 = vmatpush1.bf16.msra.mxu0 %v130
  %1137 = vmatprep.subr.bf16.mxu0 0
  %1138 = vmatpush2.bf16.msra.mxu0 0
  %1139 = vmatprep.subr.bf16.mxu0 0
  %1140 = vmatpush2.bf16.msra.mxu0 0
  %1141 = vmatprep.subr.bf16.mxu0 0
  %1142 = vmatpush2.bf16.msra.mxu0 0
  %1143 = vmatprep.subr.bf16.mxu0 0
  %1144 = vmatpush2.bf16.msra.mxu0 0
  %1145 = vmatprep.subr.bf16.mxu0 0
  %1146 = vmatpush2.bf16.msra.mxu0 0
  %1147 = vmatprep.subr.bf16.mxu0 0
  %1148 = vmatpush2.bf16.msra.mxu0 0
  %1149 = vmatprep.subr.bf16.mxu0 0
  %1150 = vmatpush2.bf16.msra.mxu0 0
  %1151 = vmatprep.subr.bf16.mxu0 0
  %1152 = vmatpush2.bf16.msra.mxu0 0
  %1153 = vmatprep.mubr.bf16.mxu0 0
  %1154 = vmatmul.mubr.bf16.gmra.mxu0 %v1119
  %v1155 = vpop.f32.mrf.mxu0
  %v1156 = vadd.f32 0.0, %v1155
  %v1157 = vpop.f32.mrf.mxu0
  %v1158 = vpop.f32.mrf.mxu0
  %v1159 = vpop.f32.mrf.mxu0
  %1160 = vdwg.mxu0
  %v1162 = vrot.slane %v1156, 2
  %v1164 = vadd.f32 %v106, %v1162
  %v1165 = vtanh.pop %v1164
  %v1166 = vmul.f32 %v1165, %v37
  %v1167 = vadd.f32 %v1166, %v38
  %v1169 = vrot.slane %v1032, 6
  %v1171 = vmul.f32 %v1167, %v1169
  %1173 = vrot.lane.b32.xlu0 %v1167, 64
  %v1174 = vpop.permute.xlu0 %1173
  %v1176 = vmul.f32 %v1167, %v1174
  %1178 = vrot.lane.b32.xlu0 %v1176, 32
  %v1179 = vpop.permute.xlu0 %1178
  %v1181 = vadd.f32 %v1171, %v1179
  %v1182 = vtanh.pop %v1181
  %1184 = vrot.lane.b32.xlu0 %v1182, 64
  %v1185 = vpop.permute.xlu0 %1184
  %v1187 = vmul.f32 %v1167, %v1185
  %1189 = vrot.lane.b32.xlu0 %v1112, 32
  %v1190 = vpop.permute.xlu0 %1189
  %v1193 = vrot.slane %v1038, 4
  %1194 = vrot.lane.b32.xlu0 %v1193, 64
  %v1195 = vpop.permute.xlu0 %1194
  %v1197 = vsel %vm134, %v1190, %v1195
  %v1198 = vpack.c.bf16 %v1197, %v1197
  %v1200 = vsel %vm309, %v1198, 0
  %1202 = vmatprep.subr.bf16.mxu0 0
  %1203 = vmatpush1.bf16.msra.mxu0 0
  %1204 = vmatprep.subr.bf16.mxu0 0
  %1205 = vmatpush1.bf16.msra.mxu0 0
  %1206 = vmatprep.subr.bf16.mxu0 0
  %1207 = vmatpush1.bf16.msra.mxu0 0
  %1208 = vmatprep.subr.bf16.mxu0 0
  %1209 = vmatpush1.bf16.msra.mxu0 0
  %1210 = vmatprep.subr.bf16.mxu0 0
  %1211 = vmatpush1.bf16.msra.mxu0 %v304
  %1212 = vmatprep.subr.bf16.mxu0 0
  %1213 = vmatpush1.bf16.msra.mxu0 %v303
  %1214 = vmatprep.subr.bf16.mxu0 0
  %1215 = vmatpush1.bf16.msra.mxu0 %v302
  %1216 = vmatprep.subr.bf16.mxu0 0
  %1217 = vmatpush1.bf16.msra.mxu0 %v301
  %1218 = vmatprep.subr.bf16.mxu0 0
  %1219 = vmatpush2.bf16.msra.mxu0 0
  %1220 = vmatprep.subr.bf16.mxu0 0
  %1221 = vmatpush2.bf16.msra.mxu0 0
  %1222 = vmatprep.subr.bf16.mxu0 0
  %1223 = vmatpush2.bf16.msra.mxu0 0
  %1224 = vmatprep.subr.bf16.mxu0 0
  %1225 = vmatpush2.bf16.msra.mxu0 0
  %1226 = vmatprep.subr.bf16.mxu0 0
  %1227 = vmatpush2.bf16.msra.mxu0 0
  %1228 = vmatprep.subr.bf16.mxu0 0
  %1229 = vmatpush2.bf16.msra.mxu0 0
  %1230 = vmatprep.subr.bf16.mxu0 0
  %1231 = vmatpush2.bf16.msra.mxu0 0
  %1232 = vmatprep.subr.bf16.mxu0 0
  %1233 = vmatpush2.bf16.msra.mxu0 0
  %1234 = vmatprep.mubr.bf16.mxu0 0
  %1235 = vmatmul.mubr.bf16.gmra.mxu0 %v1200
  %v1236 = vpop.f32.mrf.mxu0
  %v1237 = vadd.f32 %v283, %v1236
  %v1238 = vpop.f32.mrf.mxu0
  %v1239 = vpop.f32.mrf.mxu0
  %v1240 = vpop.f32.mrf.mxu0
  %1241 = vdwg.mxu0
  %v1242 = vtanh.pop %v1237
  %v1243 = vmul.f32 %v1242, %v37
  %v1244 = vadd.f32 %v1243, %v38
  %v1245 = vmul.f32 %v1244, %v1106
  %1247 = vrot.lane.b32.xlu0 %v1244, 64
  %v1248 = vpop.permute.xlu0 %1247
  %v1250 = vmul.f32 %v1244, %v1248
  %1252 = vrot.lane.b32.xlu0 %v1250, 32
  %v1253 = vpop.permute.xlu0 %1252
  %v1255 = vadd.f32 %v1245, %v1253
  %v1256 = vtanh.pop %v1255
  %1258 = vrot.lane.b32.xlu0 %v1256, 64
  %v1259 = vpop.permute.xlu0 %1258
  %v1261 = vmul.f32 %v1244, %v1259
  %1263 = vrot.lane.b32.xlu0 %v1261, 32
  %v1264 = vpop.permute.xlu0 %1263
  %v1267 = vrot.slane %v1187, 6
  %1268 = vrot.lane.b32.xlu0 %v1267, 64
  %v1269 = vpop.permute.xlu0 %1268
  %v1271 = vsel %vm134, %v1264, %v1269
  %v1272 = vpack.c.bf16 %v1271, %v1271
  %v1274 = vsel %vm309, %v1272, 0
  %1276 = vmatprep.subr.bf16.mxu0 0
  %1277 = vmatpush1.bf16.msra.mxu0 0
  %1278 = vmatprep.subr.bf16.mxu0 0
  %1279 = vmatpush1.bf16.msra.mxu0 0
  %1280 = vmatprep.subr.bf16.mxu0 0
  %1281 = vmatpush1.bf16.msra.mxu0 0
  %1282 = vmatprep.subr.bf16.mxu0 0
  %1283 = vmatpush1.bf16.msra.mxu0 0
  %1284 = vmatprep.subr.bf16.mxu0 0
  %1285 = vmatpush1.bf16.msra.mxu0 %v304
  %1286 = vmatprep.subr.bf16.mxu0 0
  %1287 = vmatpush1.bf16.msra.mxu0 %v303
  %1288 = vmatprep.subr.bf16.mxu0 0
  %1289 = vmatpush1.bf16.msra.mxu0 %v302
  %1290 = vmatprep.subr.bf16.mxu0 0
  %1291 = vmatpush1.bf16.msra.mxu0 %v301
  %1292 = vmatprep.subr.bf16.mxu0 0
  %1293 = vmatpush2.bf16.msra.mxu0 0
  %1294 = vmatprep.subr.bf16.mxu0 0
  %1295 = vmatpush2.bf16.msra.mxu0 0
  %1296 = vmatprep.subr.bf16.mxu0 0
  %1297 = vmatpush2.bf16.msra.mxu0 0
  %1298 = vmatprep.subr.bf16.mxu0 0
  %1299 = vmatpush2.bf16.msra.mxu0 0
  %1300 = vmatprep.subr.bf16.mxu0 0
  %1301 = vmatpush2.bf16.msra.mxu0 0
  %1302 = vmatprep.subr.bf16.mxu0 0
  %1303 = vmatpush2.bf16.msra.mxu0 0
  %1304 = vmatprep.subr.bf16.mxu0 0
  %1305 = vmatpush2.bf16.msra.mxu0 0
  %1306 = vmatprep.subr.bf16.mxu0 0
  %1307 = vmatpush2.bf16.msra.mxu0 0
  %1308 = vmatprep.mubr.bf16.mxu0 0
  %1309 = vmatmul.mubr.bf16.gmra.mxu0 %v1274
  %v1310 = vpop.f32.mrf.mxu0
  %v1311 = vadd.f32 %v283, %v1310
  %v1312 = vpop.f32.mrf.mxu0
  %v1313 = vpop.f32.mrf.mxu0
  %v1314 = vpop.f32.mrf.mxu0
  %1315 = vdwg.mxu0
  %v1316 = vtanh.pop %v1311
  %v1317 = vmul.f32 %v1316, %v37
  %v1318 = vadd.f32 %v1317, %v38
  %v1319 = vmul.f32 %v1318, %v1255
  %1321 = vrot.lane.b32.xlu0 %v1318, 64
  %v1322 = vpop.permute.xlu0 %1321
  %v1324 = vmul.f32 %v1318, %v1322
  %1326 = vrot.lane.b32.xlu0 %v1324, 32
  %v1327 = vpop.permute.xlu0 %1326
  %v1329 = vadd.f32 %v1319, %v1327
  %v1330 = vtanh.pop %v1329
  %1332 = vrot.lane.b32.xlu0 %v1330, 64
  %v1333 = vpop.permute.xlu0 %1332
  %v1335 = vmul.f32 %v1318, %v1333
  %v1336 = vld [vmem:[%s6] sm:$0xff]
  %v1337 = vld [vmem:[%s6 + $0x8] sm:$0xff]
  %v1338 = vld [vmem:[%s6 + $0x10] sm:$0xff]
  %v1339 = vld [vmem:[%s6 + $0x18] sm:$0xff]
  %v1340 = vld [vmem:[#allocation2] sm:$0x1]
  %v1342 = vlaneseq
  %v1343 = vshrl.u32 %v1342, 7
  %v1344 = vsub.s32 0, %v1343
  %v1345 = vrot.slane %v1340, %v1344
  %1348 = vrot.lane.b32.xlu0 %v1335, 32
  %v1349 = vpop.permute.xlu0 %1348
  %v1350 = vsel %vm134, %v1349, 0
  %1352 = vmatprep.subr.mxu0 0.0
  %1353 = vmatpush1.msra.mxu0 0.0
  %1354 = vmatprep.subr.mxu0 0.0
  %1355 = vmatpush1.msra.mxu0 0.0
  %1356 = vmatprep.subr.mxu0 0.0
  %1357 = vmatpush1.msra.mxu0 0.0
  %1358 = vmatprep.subr.mxu0 0.0
  %1359 = vmatpush1.msra.mxu0 0.0
  %1360 = vmatprep.subr.mxu0 0.0
  %1361 = vmatpush1.msra.mxu0 0.0
  %1362 = vmatprep.subr.mxu0 0.0
  %1363 = vmatpush1.msra.mxu0 0.0
  %1364 = vmatprep.subr.mxu0 0.0
  %1365 = vmatpush1.msra.mxu0 0.0
  %1366 = vmatprep.subr.mxu0 0.0
  %1367 = vmatpush1.msra.mxu0 0.0
  %1368 = vmatprep.subr.mxu0 0.0
  %1369 = vmatpush1.msra.mxu0 0.0
  %1370 = vmatprep.subr.mxu0 0.0
  %1371 = vmatpush1.msra.mxu0 0.0
  %1372 = vmatprep.subr.mxu0 0.0
  %1373 = vmatpush1.msra.mxu0 0.0
  %1374 = vmatprep.subr.mxu0 0.0
  %1375 = vmatpush1.msra.mxu0 0.0
  %1376 = vmatprep.subr.mxu0 0.0
  %1377 = vmatpush1.msra.mxu0 %v1339
  %1378 = vmatprep.subr.mxu0 0.0
  %1379 = vmatpush1.msra.mxu0 %v1338
  %1380 = vmatprep.subr.mxu0 0.0
  %1381 = vmatpush1.msra.mxu0 %v1337
  %1382 = vmatprep.subr.mxu0 0.0
  %1383 = vmatpush1.msra.mxu0 %v1336
  %1384 = vmatprep.subr.mxu0 0.0
  %1385 = vmatpush2.msra.mxu0 0.0
  %1386 = vmatprep.subr.mxu0 0.0
  %1387 = vmatpush2.msra.mxu0 0.0
  %1388 = vmatprep.subr.mxu0 0.0
  %1389 = vmatpush2.msra.mxu0 0.0
  %1390 = vmatprep.subr.mxu0 0.0
  %1391 = vmatpush2.msra.mxu0 0.0
  %1392 = vmatprep.subr.mxu0 0.0
  %1393 = vmatpush2.msra.mxu0 0.0
  %1394 = vmatprep.subr.mxu0 0.0
  %1395 = vmatpush2.msra.mxu0 0.0
  %1396 = vmatprep.subr.mxu0 0.0
  %1397 = vmatpush2.msra.mxu0 0.0
  %1398 = vmatprep.subr.mxu0 0.0
  %1399 = vmatpush2.msra.mxu0 0.0
  %1400 = vmatprep.subr.mxu0 0.0
  %1401 = vmatpush2.msra.mxu0 0.0
  %1402 = vmatprep.subr.mxu0 0.0
  %1403 = vmatpush2.msra.mxu0 0.0
  %1404 = vmatprep.subr.mxu0 0.0
  %1405 = vmatpush2.msra.mxu0 0.0
  %1406 = vmatprep.subr.mxu0 0.0
  %1407 = vmatpush2.msra.mxu0 0.0
  %1408 = vmatprep.subr.mxu0 0.0
  %1409 = vmatpush2.msra.mxu0 0.0
  %1410 = vmatprep.subr.mxu0 0.0
  %1411 = vmatpush2.msra.mxu0 0.0
  %1412 = vmatprep.subr.mxu0 0.0
  %1413 = vmatpush2.msra.mxu0 0.0
  %1414 = vmatprep.subr.mxu0 0.0
  %1415 = vmatpush2.msra.mxu0 0.0
  %1416 = vmatprep.mubr.f32.mxu0 0.0
  %1417 = vmatmul.mubr.f32.gmra.mxu0 %v1350
  %v1418 = vpop.f32.mrf.mxu0
  %v1419 = vadd.f32 %v1345, %v1418
  %v1420 = vpop.f32.mrf.mxu0
  %1421 = vdwg.mxu0
  %v1422 = vmul.f32 %v1419, 0.5
  %v1423 = vtanh.pop %v1422
  %v1424 = vmul.f32 %v1423, 0.5
  %v1425 = vadd.f32 %v1424, 0.5
  %vm1426 = vcmask 1024
  %1427 = vst.msk [vmem:[%s8] sm:$0x3] %vm1426, %v1425
  // Predicated region
  $region34: #{fatigue_lstm_forward.1} parent=0 // pred_check
    _
  $region35: #{fatigue_lstm_forward.1} parent=0 // pred_check_branch
    %1429 = sbr.rel (0) target = $region37
  $region36: #{fatigue_lstm_forward.1} parent=0 // pred_region
    _
  $region37: #{fatigue_lstm_forward.1} parent=0 // pred_fallthru
    _
  // Predicated region
  $region38: #{fatigue_lstm_forward.1} parent=0 // pred_check
    _
  $region39: #{fatigue_lstm_forward.1} parent=0 // pred_check_branch
    %1431 = sbr.rel (0) target = $region41
  $region40: #{fatigue_lstm_forward.1} parent=0 // pred_region
    _
  $region41: #{fatigue_lstm_forward.1} parent=0 // pred_fallthru
    _

</llo_original>
